<compile_context>
chip_gen: v6e
topology: v6e:2x2x1
jax: 0.10.0
libtpu: 0.0.40
codegen_flags: <defaults>
</compile_context>

<pallas_src>
import jax
import jax.numpy as jnp
from jax.experimental import pallas as pl
from jax.experimental.pallas import tpu as pltpu

_BN_EPS = 1e-5
_K = 8
_PAD = _K // 2


# ---------------------------------------------------------------------------
# wrapper-side parameter preprocessing (tiny one-time algebra on weights)
# ---------------------------------------------------------------------------
def _fold_bn(w, g, b, m, v):
    """Fold eval-mode BatchNorm1d into conv weight. w: (Cout, Cin, K) torch layout."""
    scale = g / jnp.sqrt(v + _BN_EPS)                      # (Cout,)
    return w * scale[:, None, None], b - m * scale         # (w_scaled, shift)


def _conv_toeplitz(w_scaled, n_pos, expanded):
    """Dense conv-as-matmul matrix for the flat lane-dense activation layout.

    Input lane for logical position p, channel c:
      p*Cin + c      (expanded=False, dense layout — block 1 input)
      2*p*Cin + c    (expanded=True, pool-expanded layout; odd chunks are junk
                      and get all-zero rows)
    Output lane: (l_out + 1)*Cout + c_out  — i.e. chunk 0 of the conv output is
    an all-zero chunk, so the output width is (Lout+1)*Cout (a multiple of 128)
    and the pool can be done with a single roll+max (see kernel).
    """
    c_out, c_in, k_sz = w_scaled.shape
    lout = n_pos + 2 * _PAD - k_sz + 1                      # = n_pos + 1
    p_idx = jnp.arange(n_pos)[:, None]                      # (P, 1)
    l_idx = jnp.arange(lout)[None, :]                       # (1, Lout)
    k = p_idx - l_idx + _PAD                                # tap index (P, Lout)
    valid = (k >= 0) & (k < k_sz)
    wt = jnp.transpose(w_scaled, (2, 1, 0))                 # (K, Cin, Cout)
    vals = wt[jnp.clip(k, 0, k_sz - 1)]                     # (P, Lout, Cin, Cout)
    vals = jnp.where(valid[:, :, None, None], vals, 0.0)
    # leading all-zero output chunk: output lane = (l_out + 1)*Cout + c_out
    vals = jnp.pad(vals, ((0, 0), (1, 0), (0, 0), (0, 0)))  # (P, Lout+1, Cin, Cout)
    width = (lout + 1) * c_out
    dense = jnp.transpose(vals, (0, 2, 1, 3)).reshape(n_pos, c_in, width)
    if not expanded:
        return dense.reshape(n_pos * c_in, width)
    full = jnp.zeros((n_pos, 2, c_in, width), dense.dtype).at[:, 0].set(dense)
    return full.reshape(n_pos * 2 * c_in, width)


def _head_matrix(wl, n_pos, cin, pad_to):
    """Linear over torch-flattened (B, C, P) features, re-expressed on the
    pool-expanded flat layout (position p lives at chunk 2p); output lane-padded."""
    num_classes = wl.shape[0]
    dense = jnp.transpose(wl.reshape(num_classes, cin, n_pos), (2, 1, 0))   # (P, C, nc)
    dense = jnp.pad(dense, ((0, 0), (0, 0), (0, pad_to - num_classes)))
    full = jnp.zeros((n_pos, 2, cin, pad_to), dense.dtype).at[:, 0].set(dense)
    return full.reshape(n_pos * 2 * cin, pad_to)                            # (256, 128)


# ---------------------------------------------------------------------------
# fused forward kernel
# ---------------------------------------------------------------------------
def _tstcc_kernel(x_ref, w1_ref, w2_ref, w3_ref, wl_ref, bias_ref, out_ref):
    f32 = jnp.float32
    bf16 = jnp.bfloat16

    def block(h, w_ref, b_row, cout):
        w = w_ref[...]                                       # bf16 Toeplitz matrix
        width = w.shape[1]                                   # (Lout+1)*Cout, %128==0
        # conv (+folded BN) as ONE bf16 matmul with f32 accumulation,
        # then bias + ReLU on the VPU.  Chunk 0 of `a` is exactly zero
        # (zero weight columns + zero bias lanes).
        a = jnp.dot(h.astype(bf16), w, preferred_element_type=f32) + b_row
        a = jnp.maximum(a, 0.0)
        # MaxPool1d(k=2, s=2, p=1): pooled[i] = max(conv[2i-1], conv[2i]) with
        # conv[-1] := pad (zero-pad == -inf-pad here because a >= 0 after ReLU).
        # With the leading zero chunk, rotating the chunks left by one (shift
        # width-cout == -cout) and taking the max gives
        #   chunk j = max(conv[j-1], conv[j]);
        # pooled values land in the EVEN chunks, odd chunks are junk that the
        # next layer's Toeplitz matrix ignores (zero rows).  The roll's
        # wrap-around chunk is the (zero) leading chunk -> correct right pad.
        return jnp.maximum(a, pltpu.roll(a, shift=width - cout, axis=1))

    h = x_ref[...]                                           # (TB, 18)
    h = block(h, w1_ref, bias_ref[0:1, 0:640], 32)           # (TB, 640)
    h = block(h, w2_ref, bias_ref[1:2, 0:768], 64)           # (TB, 768)
    h = block(h, w3_ref, bias_ref[2:3, 0:256], 32)           # (TB, 256)
    # Dropout(p=0.35) after block 1 is identity at inference time.
    logits = jnp.dot(h.astype(bf16), wl_ref[...],
                     preferred_element_type=f32) + bias_ref[3:4, 0:128]
    out_ref[:, 0:256] = h                                    # lane-aligned stores
    out_ref[:, 256:384] = logits


def tstcc_forward(x_in, p):
    """x_in: (B, 1, 18) float32 (PyTorch NCL). Returns (logits (B,2), feat (B,32,4))."""
    B = x_in.shape[0]
    x_flat = x_in.reshape(B, 18).astype(jnp.float32)            # Cin = 1

    # fold BN, build flat conv matrices (bf16) + packed f32 biases (wrapper, tiny)
    w1s, s1 = _fold_bn(p["w1"], p["g1"], p["b1"], p["m1"], p["v1"])
    w2s, s2 = _fold_bn(p["w2"], p["g2"], p["b2"], p["m2"], p["v2"])
    w3s, s3 = _fold_bn(p["w3"], p["g3"], p["b3"], p["m3"], p["v3"])

    W1 = _conv_toeplitz(w1s, n_pos=18, expanded=False).astype(jnp.bfloat16)   # (18, 640)
    W2 = _conv_toeplitz(w2s, n_pos=10, expanded=True).astype(jnp.bfloat16)    # (640, 768)
    W3 = _conv_toeplitz(w3s, n_pos=6, expanded=True).astype(jnp.bfloat16)     # (768, 256)
    WL = _head_matrix(p["wl"], n_pos=4, cin=32, pad_to=128).astype(jnp.bfloat16)  # (256,128)

    # biases on the (Lout+1)-chunk layouts; the leading Cout lanes of each row
    # MUST stay exactly zero (pooled position 0 relies on a zero chunk 0).
    bias = jnp.zeros((4, 768), jnp.float32)
    bias = bias.at[0, 32:640].set(jnp.tile(s1, 19))
    bias = bias.at[1, 64:768].set(jnp.tile(s2, 11))
    bias = bias.at[2, 32:256].set(jnp.tile(s3, 7))
    bias = bias.at[3, 0:2].set(p["bl"])

    # TB <= 256: keeps double-buffered weights + intermediates well inside the
    # v5e 16 MiB scoped-VMEM default; multiples of 256 are also what v6e/v7x
    # want for throughput at large B.  B=8 is a single step; large batches
    # pipeline / shard across TensorCores because the axis is "parallel".
    TB = B if B <= 256 else 256
    Bp = pl.cdiv(B, TB) * TB
    if Bp != B:
        x_flat = jnp.pad(x_flat, ((0, Bp - B), (0, 0)))

    out = pl.pallas_call(
        _tstcc_kernel,
        grid=(Bp // TB,),
        in_specs=[
            pl.BlockSpec((TB, 18), lambda i: (i, 0)),
            pl.BlockSpec(W1.shape, lambda i: (0, 0)),
            pl.BlockSpec(W2.shape, lambda i: (0, 0)),
            pl.BlockSpec(W3.shape, lambda i: (0, 0)),
            pl.BlockSpec(WL.shape, lambda i: (0, 0)),
            pl.BlockSpec(bias.shape, lambda i: (0, 0)),
        ],
        out_specs=pl.BlockSpec((TB, 384), lambda i: (i, 0)),
        out_shape=jax.ShapeDtypeStruct((Bp, 384), jnp.float32),
        compiler_params=pltpu.CompilerParams(dimension_semantics=("parallel",)),
    )(x_flat, W1, W2, W3, WL, bias)

    out = out[:B]
    logits = out[:, 256:258]                                    # (B, 2)
    feat = out[:, :256].reshape(B, 4, 2, 32)[:, :, 0, :]        # (B, 4, 32) = [b, p, c]
    feat = jnp.transpose(feat, (0, 2, 1))                       # (B, 32, 4) torch layout
    return logits, feat


# ---------------------------------------------------------------------------
# pure-JAX reference (mirrors the PyTorch module in eval mode, fp32 HIGHEST)
# ---------------------------------------------------------------------------
def reference_forward(x_in, p):
    def block(x, w, g, b, m, v):
        y = jax.lax.conv_general_dilated(
            x, w, window_strides=(1,), padding=[(4, 4)],
            dimension_numbers=("NCH", "OIH", "NCH"),
            precision=jax.lax.Precision.HIGHEST)
        y = (y - m[None, :, None]) * (g[None, :, None]
                                      / jnp.sqrt(v[None, :, None] + _BN_EPS)) + b[None, :, None]
        y = jnp.maximum(y, 0.0)
        y = jax.lax.reduce_window(y, -jnp.inf, jax.lax.max,
                                  (1, 1, 2), (1, 1, 2),
                                  [(0, 0), (0, 0), (1, 1)])
        return y

    h = block(x_in, p["w1"], p["g1"], p["b1"], p["m1"], p["v1"])
    h = block(h, p["w2"], p["g2"], p["b2"], p["m2"], p["v2"])
    h = block(h, p["w3"], p["g3"], p["b3"], p["m3"], p["v3"])
    x_flat = h.reshape(h.shape[0], -1)
    logits = jnp.dot(x_flat, p["wl"].T, precision=jax.lax.Precision.HIGHEST) + p["bl"]
    return logits, h


# ---------------------------------------------------------------------------
def make_params(key):
    ks = jax.random.split(key, 18)
    f32 = jnp.float32

    def bn_params(k0, k1, k2, k3, c):
        return (jax.random.uniform(k0, (c,), f32, 0.5, 1.5),       # gamma
                jax.random.normal(k1, (c,), f32) * 0.1,            # beta
                jax.random.normal(k2, (c,), f32) * 0.1,            # running_mean
                jax.random.uniform(k3, (c,), f32, 0.5, 1.5))       # running_var

    p = {}
    p["w1"] = jax.random.normal(ks[0], (32, 1, 8), f32) * 0.2
    p["g1"], p["b1"], p["m1"], p["v1"] = bn_params(ks[1], ks[2], ks[3], ks[4], 32)
    p["w2"] = jax.random.normal(ks[5], (64, 32, 8), f32) * 0.1
    p["g2"], p["b2"], p["m2"], p["v2"] = bn_params(ks[6], ks[7], ks[8], ks[9], 64)
    p["w3"] = jax.random.normal(ks[10], (32, 64, 8), f32) * 0.1
    p["g3"], p["b3"], p["m3"], p["v3"] = bn_params(ks[11], ks[12], ks[13], ks[14], 32)
    p["wl"] = jax.random.normal(ks[15], (2, 128), f32) * 0.1
    p["bl"] = jax.random.normal(ks[16], (2,), f32) * 0.1
    return p, ks[17]


if __name__ == "__main__":
    key = jax.random.PRNGKey(0)
    params, xkey = make_params(key)

    B = 8
    # conf: input_channels=1, window_size=18, features_len=4, final_out_channels=32
    x_in = jax.random.normal(xkey, (B, 1, 18), jnp.float32)

    logits, feat = tstcc_forward(x_in, params)
    logits = jax.block_until_ready(logits)
    feat = jax.block_until_ready(feat)

    ref_logits, ref_feat = reference_forward(x_in, params)

    assert logits.shape == (B, 2) and feat.shape == (B, 32, 4)
    # tolerance covers bf16-stored Toeplitz weights + bf16 MXU operand passes
    # (explicit bf16 casts) vs. the fp32 HIGHEST-precision reference; genuine
    # layout/pooling bugs produce O(0.1+) errors and are still caught.
    assert jnp.allclose(logits, ref_logits, atol=2e-2, rtol=2e-2), "logits mismatch"
    assert jnp.allclose(feat, ref_feat, atol=2e-2, rtol=2e-2), "feature mismatch"

    print("KERNEL_OK")
</pallas_src>

<mosaic_0001>
module attributes {stable_mosaic.version = 11 : i64} {
  func.func @_tstcc_kernel(%arg0: i32, %arg1: memref<8x18xf32, #tpu.memory_space<vmem>>, %arg2: memref<18x640xbf16, #tpu.memory_space<vmem>>, %arg3: memref<640x768xbf16, #tpu.memory_space<vmem>>, %arg4: memref<768x256xbf16, #tpu.memory_space<vmem>>, %arg5: memref<256x128xbf16, #tpu.memory_space<vmem>>, %arg6: memref<4x768xf32, #tpu.memory_space<vmem>>, %arg7: memref<8x384xf32, #tpu.memory_space<vmem>>) attributes {dimension_semantics = [#tpu.dimension_semantics<parallel>], iteration_bounds = array<i64: 1>, scalar_prefetch = 0 : i64, scratch_operands = 0 : i64, tpu.core_type = #tpu.core_type<tc>, window_params = [{transform_indices = @transform_0, window_bounds = array<i64: 8, 18>}, {pipeline_mode = #tpu.pipeline_mode<synchronous>, transform_indices = @transform_1, window_bounds = array<i64: 18, 640>}, {pipeline_mode = #tpu.pipeline_mode<synchronous>, transform_indices = @transform_2, window_bounds = array<i64: 640, 768>}, {pipeline_mode = #tpu.pipeline_mode<synchronous>, transform_indices = @transform_3, window_bounds = array<i64: 768, 256>}, {pipeline_mode = #tpu.pipeline_mode<synchronous>, transform_indices = @transform_4, window_bounds = array<i64: 256, 128>}, {pipeline_mode = #tpu.pipeline_mode<synchronous>, transform_indices = @transform_5, window_bounds = array<i64: 4, 768>}, {transform_indices = @transform_6, window_bounds = array<i64: 8, 384>}]} {
    %c0 = arith.constant 0 : index
    %c0_0 = arith.constant 0 : index
    %0 = vector.load %arg1[%c0, %c0_0] : memref<8x18xf32, #tpu.memory_space<vmem>>, vector<8x18xf32>
    %c0_1 = arith.constant 0 : index
    %c0_2 = arith.constant 0 : index
    %1 = vector.load %arg6[%c0_1, %c0_2] : memref<4x768xf32, #tpu.memory_space<vmem>>, vector<1x640xf32>
    %c0_3 = arith.constant 0 : index
    %c0_4 = arith.constant 0 : index
    %2 = vector.load %arg2[%c0_3, %c0_4] : memref<18x640xbf16, #tpu.memory_space<vmem>>, vector<18x640xbf16>
    %3 = arith.truncf %0 : vector<8x18xf32> to vector<8x18xbf16>
    %cst = arith.constant dense<0.000000e+00> : vector<8x640xf32>
    %4 = tpu.matmul %3, %2, %cst {dimension_numbers = #tpu.dot_dimension_numbers<[1], [0], [0], [1], [0, 0, 1, 1], [], []>} : vector<8x18xbf16>, vector<18x640xbf16>, vector<8x640xf32> -> vector<8x640xf32>
    %5 = vector.broadcast %1 : vector<1x640xf32> to vector<8x640xf32>
    %6 = arith.addf %4, %5 : vector<8x640xf32>
    %cst_5 = arith.constant 0.000000e+00 : f32
    %7 = vector.broadcast %cst_5 : f32 to vector<8x640xf32>
    %8 = arith.maximumf %6, %7 : vector<8x640xf32>
    %c608_i32 = arith.constant 608 : i32
    %9 = tpu.dynamic_rotate %8 by %c608_i32 dim 1 : vector<8x640xf32>, i32 -> vector<8x640xf32>
    %10 = arith.maximumf %8, %9 : vector<8x640xf32>
    %c1 = arith.constant 1 : index
    %c0_6 = arith.constant 0 : index
    %11 = vector.load %arg6[%c1, %c0_6] : memref<4x768xf32, #tpu.memory_space<vmem>>, vector<1x768xf32>
    %c0_7 = arith.constant 0 : index
    %c0_8 = arith.constant 0 : index
    %12 = vector.load %arg3[%c0_7, %c0_8] : memref<640x768xbf16, #tpu.memory_space<vmem>>, vector<640x768xbf16>
    %13 = arith.truncf %10 : vector<8x640xf32> to vector<8x640xbf16>
    %cst_9 = arith.constant dense<0.000000e+00> : vector<8x768xf32>
    %14 = tpu.matmul %13, %12, %cst_9 {dimension_numbers = #tpu.dot_dimension_numbers<[1], [0], [0], [1], [0, 0, 1, 1], [], []>} : vector<8x640xbf16>, vector<640x768xbf16>, vector<8x768xf32> -> vector<8x768xf32>
    %15 = vector.broadcast %11 : vector<1x768xf32> to vector<8x768xf32>
    %16 = arith.addf %14, %15 : vector<8x768xf32>
    %cst_10 = arith.constant 0.000000e+00 : f32
    %17 = vector.broadcast %cst_10 : f32 to vector<8x768xf32>
    %18 = arith.maximumf %16, %17 : vector<8x768xf32>
    %c704_i32 = arith.constant 704 : i32
    %19 = tpu.dynamic_rotate %18 by %c704_i32 dim 1 : vector<8x768xf32>, i32 -> vector<8x768xf32>
    %20 = arith.maximumf %18, %19 : vector<8x768xf32>
    %c2 = arith.constant 2 : index
    %c0_11 = arith.constant 0 : index
    %21 = vector.load %arg6[%c2, %c0_11] : memref<4x768xf32, #tpu.memory_space<vmem>>, vector<1x256xf32>
    %c0_12 = arith.constant 0 : index
    %c0_13 = arith.constant 0 : index
    %22 = vector.load %arg4[%c0_12, %c0_13] : memref<768x256xbf16, #tpu.memory_space<vmem>>, vector<768x256xbf16>
    %23 = arith.truncf %20 : vector<8x768xf32> to vector<8x768xbf16>
    %cst_14 = arith.constant dense<0.000000e+00> : vector<8x256xf32>
    %24 = tpu.matmul %23, %22, %cst_14 {dimension_numbers = #tpu.dot_dimension_numbers<[1], [0], [0], [1], [0, 0, 1, 1], [], []>} : vector<8x768xbf16>, vector<768x256xbf16>, vector<8x256xf32> -> vector<8x256xf32>
    %25 = vector.broadcast %21 : vector<1x256xf32> to vector<8x256xf32>
    %26 = arith.addf %24, %25 : vector<8x256xf32>
    %cst_15 = arith.constant 0.000000e+00 : f32
    %27 = vector.broadcast %cst_15 : f32 to vector<8x256xf32>
    %28 = arith.maximumf %26, %27 : vector<8x256xf32>
    %c224_i32 = arith.constant 224 : i32
    %29 = tpu.dynamic_rotate %28 by %c224_i32 dim 1 : vector<8x256xf32>, i32 -> vector<8x256xf32>
    %30 = arith.maximumf %28, %29 : vector<8x256xf32>
    %31 = arith.truncf %30 : vector<8x256xf32> to vector<8x256xbf16>
    %c0_16 = arith.constant 0 : index
    %c0_17 = arith.constant 0 : index
    %32 = vector.load %arg5[%c0_16, %c0_17] : memref<256x128xbf16, #tpu.memory_space<vmem>>, vector<256x128xbf16>
    %cst_18 = arith.constant dense<0.000000e+00> : vector<8x128xf32>
    %33 = tpu.matmul %31, %32, %cst_18 {dimension_numbers = #tpu.dot_dimension_numbers<[1], [0], [0], [1], [0, 0, 1, 1], [], []>} : vector<8x256xbf16>, vector<256x128xbf16>, vector<8x128xf32> -> vector<8x128xf32>
    %c3 = arith.constant 3 : index
    %c0_19 = arith.constant 0 : index
    %34 = vector.load %arg6[%c3, %c0_19] : memref<4x768xf32, #tpu.memory_space<vmem>>, vector<1x128xf32>
    %35 = vector.broadcast %34 : vector<1x128xf32> to vector<8x128xf32>
    %36 = arith.addf %33, %35 : vector<8x128xf32>
    %c0_20 = arith.constant 0 : index
    %c0_21 = arith.constant 0 : index
    %37 = vector.load %arg7[%c0_20, %c0_21] : memref<8x384xf32, #tpu.memory_space<vmem>>, vector<8x256xf32>
    tpu.vector_store %arg7[%c0_20, %c0_21], %30 {strides = array<i32>} : memref<8x384xf32, #tpu.memory_space<vmem>>, vector<8x256xf32>,
    %c0_22 = arith.constant 0 : index
    %c256 = arith.constant 256 : index
    %38 = vector.load %arg7[%c0_22, %c256] : memref<8x384xf32, #tpu.memory_space<vmem>>, vector<8x128xf32>
    tpu.vector_store %arg7[%c0_22, %c256], %36 {strides = array<i32>} : memref<8x384xf32, #tpu.memory_space<vmem>>, vector<8x128xf32>,
    return
  }
  func.func @transform_0(%arg0: i32) -> (i32, i32) {
    %c0_i32 = arith.constant 0 : i32
    %c0_i32_0 = arith.constant 0 : i32
    return %arg0, %c0_i32 : i32, i32
  }
  func.func @transform_1(%arg0: i32) -> (i32, i32) {
    %c0_i32 = arith.constant 0 : i32
    %c0_i32_0 = arith.constant 0 : i32
    %c0_i32_1 = arith.constant 0 : i32
    return %c0_i32, %c0_i32_0 : i32, i32
  }
  func.func @transform_2(%arg0: i32) -> (i32, i32) {
    %c0_i32 = arith.constant 0 : i32
    %c0_i32_0 = arith.constant 0 : i32
    %c0_i32_1 = arith.constant 0 : i32
    return %c0_i32, %c0_i32_0 : i32, i32
  }
  func.func @transform_3(%arg0: i32) -> (i32, i32) {
    %c0_i32 = arith.constant 0 : i32
    %c0_i32_0 = arith.constant 0 : i32
    %c0_i32_1 = arith.constant 0 : i32
    return %c0_i32, %c0_i32_0 : i32, i32
  }
  func.func @transform_4(%arg0: i32) -> (i32, i32) {
    %c0_i32 = arith.constant 0 : i32
    %c0_i32_0 = arith.constant 0 : i32
    %c0_i32_1 = arith.constant 0 : i32
    return %c0_i32, %c0_i32_0 : i32, i32
  }
  func.func @transform_5(%arg0: i32) -> (i32, i32) {
    %c0_i32 = arith.constant 0 : i32
    %c0_i32_0 = arith.constant 0 : i32
    %c0_i32_1 = arith.constant 0 : i32
    return %c0_i32, %c0_i32_0 : i32, i32
  }
  func.func @transform_6(%arg0: i32) -> (i32, i32) {
    %c0_i32 = arith.constant 0 : i32
    %c0_i32_0 = arith.constant 0 : i32
    return %arg0, %c0_i32 : i32, i32
  }
}

</mosaic_0001>

<llo_original>
// kernel: tpu_custom_call.1
$region0: #{tpu_custom_call.1}
  #allocation0 [shape = 'u32[]', space=smem, size = 0x4, offset = 0x4, fixed_abs, tag = 'smem constant byte address 0x4 - core index']
  #allocation1 [shape = 'u32[144,128]{1,0:T(1,128)}', space=vmem, size = 0x12000, scoped, tag = 'internal scratch']
  %s0 = inlined_call_operand.hbm [shape: f32[8,18], index: 0, kind: input, shape index: {}]
  %s1 = inlined_call_operand.hbm [shape: bf16[18,640], index: 1, kind: input, shape index: {}]
  %s2 = inlined_call_operand.hbm [shape: bf16[640,768], index: 2, kind: input, shape index: {}]
  %s3 = inlined_call_operand.hbm [shape: bf16[768,256], index: 3, kind: input, shape index: {}]
  %s4 = inlined_call_operand.hbm [shape: bf16[256,128], index: 4, kind: input, shape index: {}]
  %s5 = inlined_call_operand.hbm [shape: f32[4,768], index: 5, kind: input, shape index: {}]
  %s6 = inlined_call_operand.hbm [shape: f32[8,384], index: 6, kind: output, shape index: {}]
  %s7 = sld [smem:[#allocation0]]
  $region58: #{tpu_custom_call.1} parent=0
    _
  %s9 = ssub.s32 1, %s7
  %s10 = scalar_select 0, %s9, %s7
  $region1: #{tpu_custom_call.1} parent=0
    #allocation2 [shape = 'u8[4096]{0}', space=vmem, size = 0x1000, scoped, tag = 'input window, operand 0, single buffered']
    #allocation3 [shape = 's32[1]{0}', space=sflag, size = 0x4, scoped, tag = 'scoped memory for tpu_custom_call.1']
    #allocation4 [shape = 's32[1]{0}', space=sflag, size = 0x4, scoped, tag = 'scoped memory for tpu_custom_call.1']
    #allocation5 [shape = 'u8[30720]{0}', space=vmem, size = 0x7800, scoped, tag = 'input window, operand 1, single buffered']
    #allocation6 [shape = 's32[1]{0}', space=sflag, size = 0x4, scoped, tag = 'scoped memory for tpu_custom_call.1']
    #allocation7 [shape = 'u8[983040]{0}', space=vmem, size = 0xf0000, scoped, tag = 'input window, operand 2, single buffered']
    #allocation8 [shape = 'u8[393216]{0}', space=vmem, size = 0x60000, scoped, tag = 'input window, operand 3, single buffered']
    #allocation9 [shape = 's32[1]{0}', space=sflag, size = 0x4, scoped, tag = 'scoped memory for tpu_custom_call.1']
    #allocation10 [shape = 'u8[65536]{0}', space=vmem, size = 0x10000, scoped, tag = 'input window, operand 4, single buffered']
    #allocation11 [shape = 'u8[12288]{0}', space=vmem, size = 0x3000, scoped, tag = 'input window, operand 5, single buffered']
    #allocation12 [shape = 's32[1]{0}', space=sflag, size = 0x4, scoped, tag = 'scoped memory for tpu_custom_call.1']
    #allocation13 [shape = 'u8[12288]{0}', space=vmem, size = 0x3000, scoped, tag = 'output window, operand 0, single buffered']
    %11 = vsyncpa [#allocation3], 0
    %12 = vsyncpa [#allocation6], 0
    %13 = vsyncpa [#allocation9], 0
    %14 = vsyncpa [#allocation12], 0
    %15 = vsyncpa [#allocation4], 0
    // Predicated region
    $region2: #{tpu_custom_call.1} parent=1 // pred_check
      _
    $region3: #{tpu_custom_call.1} parent=1 // pred_check_branch
      %17 = sbr.rel (0) target = $region5
    $region4: #{tpu_custom_call.1} parent=1 // pred_region
      %s19 = ssub.s32 128, 128
      %20 = vsyncadd [#allocation3], %s19
      %s22 = sshll.u32 [#allocation2], 4
      %s23 = int_to_ptr.vmem [resolvable:$true] %s22
      %25 = dma.hbm_to_vmem [thread:$0]  %s0, 128, %s23, [#allocation3]
    $region5: #{tpu_custom_call.1} parent=1 // pred_fallthru
      _
    // Predicated region
    $region6: #{tpu_custom_call.1} parent=1 // pred_check
      _
    $region7: #{tpu_custom_call.1} parent=1 // pred_check_branch
      %27 = sbr.rel (0) target = $region9
    $region8: #{tpu_custom_call.1} parent=1 // pred_region
      %s29 = ssub.s32 960, 960
      %30 = vsyncadd [#allocation6], %s29
      %s31 = sshll.u32 [#allocation5], 4
      %s32 = int_to_ptr.vmem [resolvable:$true] %s31
      %37 = dma.hbm_to_vmem [thread:$0]  %s1, 960, %s32, [#allocation6], 320, 320, 20
    $region9: #{tpu_custom_call.1} parent=1 // pred_fallthru
      _
    // Predicated region
    $region10: #{tpu_custom_call.1} parent=1 // pred_check
      _
    $region11: #{tpu_custom_call.1} parent=1 // pred_check_branch
      %39 = sbr.rel (0) target = $region13
    $region12: #{tpu_custom_call.1} parent=1 // pred_region
      %s41 = ssub.s32 30720, 30720
      %42 = vsyncadd [#allocation6], %s41
      %s43 = sshll.u32 [#allocation7], 4
      %s44 = int_to_ptr.vmem [resolvable:$true] %s43
      %49 = dma.hbm_to_vmem [thread:$0]  %s2, 30720, %s44, [#allocation6], 384, 384, 24
    $region13: #{tpu_custom_call.1} parent=1 // pred_fallthru
      _
    // Predicated region
    $region14: #{tpu_custom_call.1} parent=1 // pred_check
      _
    $region15: #{tpu_custom_call.1} parent=1 // pred_check_branch
      %51 = sbr.rel (0) target = $region17
    $region16: #{tpu_custom_call.1} parent=1 // pred_region
      %s53 = ssub.s32 12288, 12288
      %54 = vsyncadd [#allocation9], %s53
      %s55 = sshll.u32 [#allocation8], 4
      %s56 = int_to_ptr.vmem [resolvable:$true] %s55
      %61 = dma.hbm_to_vmem [thread:$0]  %s3, 12288, %s56, [#allocation9], 128, 128, 8
    $region17: #{tpu_custom_call.1} parent=1 // pred_fallthru
      _
    // Predicated region
    $region18: #{tpu_custom_call.1} parent=1 // pred_check
      _
    $region19: #{tpu_custom_call.1} parent=1 // pred_check_branch
      %63 = sbr.rel (0) target = $region21
    $region20: #{tpu_custom_call.1} parent=1 // pred_region
      %s65 = ssub.s32 2048, 2048
      %66 = vsyncadd [#allocation9], %s65
      %s67 = sshll.u32 [#allocation10], 4
      %s68 = int_to_ptr.vmem [resolvable:$true] %s67
      %73 = dma.hbm_to_vmem [thread:$0]  %s4, 2048, %s68, [#allocation9], 64, 64, 4
    $region21: #{tpu_custom_call.1} parent=1 // pred_fallthru
      _
    // Predicated region
    $region22: #{tpu_custom_call.1} parent=1 // pred_check
      _
    $region23: #{tpu_custom_call.1} parent=1 // pred_check_branch
      %75 = sbr.rel (0) target = $region25
    $region24: #{tpu_custom_call.1} parent=1 // pred_region
      %s77 = ssub.s32 384, 384
      %78 = vsyncadd [#allocation12], %s77
      %s80 = sshll.u32 [#allocation11], 4
      %s81 = int_to_ptr.vmem [resolvable:$true] %s80
      %83 = dma.hbm_to_vmem [thread:$0]  %s5, 384, %s81, [#allocation12]
    $region25: #{tpu_custom_call.1} parent=1 // pred_fallthru
      _
    // Predicated region
    $region26: #{tpu_custom_call.1} parent=1 // pred_check
      _
    $region27: #{tpu_custom_call.1} parent=1 // pred_check_branch
      %85 = sbr.rel (0) target = $region29
    $region28: #{tpu_custom_call.1} parent=1 // pred_region
      %86 = dma.done [#allocation3], 128
    $region29: #{tpu_custom_call.1} parent=1 // pred_fallthru
      _
    // Predicated region
    $region30: #{tpu_custom_call.1} parent=1 // pred_check
      _
    $region31: #{tpu_custom_call.1} parent=1 // pred_check_branch
      %88 = sbr.rel (0) target = $region33
    $region32: #{tpu_custom_call.1} parent=1 // pred_region
      %89 = dma.done [#allocation6], 960
    $region33: #{tpu_custom_call.1} parent=1 // pred_fallthru
      _
    // Predicated region
    $region34: #{tpu_custom_call.1} parent=1 // pred_check
      _
    $region35: #{tpu_custom_call.1} parent=1 // pred_check_branch
      %91 = sbr.rel (0) target = $region37
    $region36: #{tpu_custom_call.1} parent=1 // pred_region
      %92 = dma.done [#allocation6], 30720
    $region37: #{tpu_custom_call.1} parent=1 // pred_fallthru
      _
    // Predicated region
    $region38: #{tpu_custom_call.1} parent=1 // pred_check
      _
    $region39: #{tpu_custom_call.1} parent=1 // pred_check_branch
      %94 = sbr.rel (0) target = $region41
    $region40: #{tpu_custom_call.1} parent=1 // pred_region
      %95 = dma.done [#allocation9], 12288
    $region41: #{tpu_custom_call.1} parent=1 // pred_fallthru
      _
    // Predicated region
    $region42: #{tpu_custom_call.1} parent=1 // pred_check
      _
    $region43: #{tpu_custom_call.1} parent=1 // pred_check_branch
      %97 = sbr.rel (0) target = $region45
    $region44: #{tpu_custom_call.1} parent=1 // pred_region
      %98 = dma.done [#allocation9], 2048
    $region45: #{tpu_custom_call.1} parent=1 // pred_fallthru
      _
    // Predicated region
    $region46: #{tpu_custom_call.1} parent=1 // pred_check
      _
    $region47: #{tpu_custom_call.1} parent=1 // pred_check_branch
      %100 = sbr.rel (0) target = $region49
    $region48: #{tpu_custom_call.1} parent=1 // pred_region
      %101 = dma.done [#allocation12], 384
    $region49: #{tpu_custom_call.1} parent=1 // pred_fallthru
      _
    %v103 = vld [vmem:[#allocation2] sm:$0xff]
    %v104 = vld [vmem:[#allocation11] ss:$4 sm:$0x1f]
    %v105 = vld [vmem:[#allocation5] sm:$0xff]
    %v106 = vld [vmem:[#allocation5 + $0x8] sm:$0xff]
    %v107 = vld [vmem:[#allocation5 + $0x10] sm:$0xf]
    %v108 = vld [vmem:[#allocation5 + $0x14] sm:$0xff]
    %v109 = vld [vmem:[#allocation5 + $0x1c] sm:$0xff]
    %v110 = vld [vmem:[#allocation5 + $0x24] sm:$0xf]
    %v111 = vld [vmem:[#allocation5 + $0x28] sm:$0x11]
    %v112 = vld [vmem:[#allocation5 + $0x30] sm:$0x11]
    %v113 = vld [vmem:[#allocation5 + $0x38] sm:$0x1]
    %v114 = vpack.c.bf16 %v103, %v103
    %v116 = vlaneseq
    %v117 = vshrl.u32 %v116, 7
    %v118 = vsub.s32 0, %v117
    %v119 = vrot.slane %v104, %v118
    %v120 = vlaneseq
    %v121 = vshrl.u32 %v120, 7
    %v122 = vsub.s32 1, %v121
    %v123 = vrot.slane %v104, %v122
    %v124 = vlaneseq
    %v125 = vshrl.u32 %v124, 7
    %v126 = vsub.s32 2, %v125
    %v127 = vrot.slane %v104, %v126
    %v128 = vlaneseq
    %v129 = vshrl.u32 %v128, 7
    %v130 = vsub.s32 3, %v129
    %v131 = vrot.slane %v104, %v130
    %v132 = vlaneseq
    %v133 = vshrl.u32 %v132, 7
    %v134 = vsub.s32 4, %v133
    %v135 = vrot.slane %v104, %v134
    %v150 = vunpack.c.l.b16 %v105
    %v151 = vunpack.c.h.b16 %v105
    %v152 = vunpack.c.l.b16 %v106
    %v153 = vunpack.c.h.b16 %v106
    %v154 = vunpack.c.l.b16 %v107
    %v155 = vunpack.c.l.b16 %v108
    %v156 = vunpack.c.h.b16 %v108
    %v157 = vunpack.c.l.b16 %v109
    %v158 = vunpack.c.h.b16 %v109
    %v159 = vunpack.c.l.b16 %v110
    %v160 = vunpack.c.l.b16 %v111
    %v161 = vunpack.c.h.b16 %v111
    %v162 = vunpack.c.l.b16 %v112
    %v163 = vunpack.c.h.b16 %v112
    %v164 = vunpack.c.l.b16 %v113
    %v165 = vpack.c.b16 %v155, %v150
    %v166 = vpack.c.b16 %v156, %v151
    %v167 = vpack.c.b16 %v157, %v152
    %v168 = vpack.c.b16 %v158, %v153
    %v169 = vpack.c.b16 %v159, %v154
    %v170 = vpack.c.b16 %v160, %v160
    %v171 = vpack.c.b16 %v161, %v161
    %v172 = vpack.c.b16 %v162, %v162
    %v173 = vpack.c.b16 %v163, %v163
    %v174 = vpack.c.b16 %v164, %v164
    %vm180 = vcmask 146432
    %v182 = vsel %vm180, %v114, 0
    %vm184 = vcmask 1040384
    %v186 = vsel %vm184, %v170, 0
    %v189 = vsel %vm184, %v171, 0
    %v192 = vsel %vm184, %v172, 0
    %v195 = vsel %vm184, %v173, 0
    %v198 = vsel %vm184, %v174, 0
    %200 = vmatprep.subr.bf16.mxu0 0
    %201 = vmatpush1.bf16.msra.mxu0 0
    %202 = vmatprep.subr.bf16.mxu0 0
    %203 = vmatpush1.bf16.msra.mxu0 0
    %204 = vmatprep.subr.bf16.mxu0 0
    %205 = vmatpush1.bf16.msra.mxu0 0
    %206 = vmatprep.subr.bf16.mxu0 0
    %207 = vmatpush1.bf16.msra.mxu0 0
    %208 = vmatprep.subr.bf16.mxu0 0
    %209 = vmatpush1.bf16.msra.mxu0 0
    %210 = vmatprep.subr.bf16.mxu0 0
    %211 = vmatpush1.bf16.msra.mxu0 0
    %212 = vmatprep.subr.bf16.mxu0 %v189
    %213 = vmatpush1.bf16.msra.mxu0 %v186
    %214 = vmatprep.subr.bf16.mxu0 %v166
    %215 = vmatpush1.bf16.msra.mxu0 %v165
    %216 = vmatprep.subr.bf16.mxu0 0
    %217 = vmatpush2.bf16.msra.mxu0 0
    %218 = vmatprep.subr.bf16.mxu0 0
    %219 = vmatpush2.bf16.msra.mxu0 0
    %220 = vmatprep.subr.bf16.mxu0 0
    %221 = vmatpush2.bf16.msra.mxu0 0
    %222 = vmatprep.subr.bf16.mxu0 0
    %223 = vmatpush2.bf16.msra.mxu0 0
    %224 = vmatprep.subr.bf16.mxu0 0
    %225 = vmatpush2.bf16.msra.mxu0 0
    %226 = vmatprep.subr.bf16.mxu0 0
    %227 = vmatpush2.bf16.msra.mxu0 0
    %228 = vmatprep.subr.bf16.mxu0 0
    %229 = vmatpush2.bf16.msra.mxu0 0
    %230 = vmatprep.subr.bf16.mxu0 0
    %231 = vmatpush2.bf16.msra.mxu0 0
    %232 = vmatprep.mubr.bf16.mxu0 0
    %233 = vmatmul.mubr.bf16.gmra.mxu0 %v182
    %v234 = vpop.f32.mrf.mxu0
    %v235 = vadd.f32 %v119, %v234
    %v236 = vpop.f32.mrf.mxu0
    %v237 = vadd.f32 %v123, %v236
    %v238 = vpop.f32.mrf.mxu0
    %v239 = vpop.f32.mrf.mxu0
    %240 = vdwg.mxu0
    %241 = vmatprep.subr.bf16.mxu0 0
    %242 = vmatpush1.bf16.msra.mxu0 0
    %243 = vmatprep.subr.bf16.mxu0 0
    %244 = vmatpush1.bf16.msra.mxu0 0
    %245 = vmatprep.subr.bf16.mxu0 0
    %246 = vmatpush1.bf16.msra.mxu0 0
    %247 = vmatprep.subr.bf16.mxu0 0
    %248 = vmatpush1.bf16.msra.mxu0 0
    %249 = vmatprep.subr.bf16.mxu0 0
    %250 = vmatpush1.bf16.msra.mxu0 0
    %251 = vmatprep.subr.bf16.mxu0 0
    %252 = vmatpush1.bf16.msra.mxu0 0
    %253 = vmatprep.subr.bf16.mxu0 %v195
    %254 = vmatpush1.bf16.msra.mxu0 %v192
    %255 = vmatprep.subr.bf16.mxu0 %v168
    %256 = vmatpush1.bf16.msra.mxu0 %v167
    %257 = vmatprep.subr.bf16.mxu0 0
    %258 = vmatpush2.bf16.msra.mxu0 0
    %259 = vmatprep.subr.bf16.mxu0 0
    %260 = vmatpush2.bf16.msra.mxu0 0
    %261 = vmatprep.subr.bf16.mxu0 0
    %262 = vmatpush2.bf16.msra.mxu0 0
    %263 = vmatprep.subr.bf16.mxu0 0
    %264 = vmatpush2.bf16.msra.mxu0 0
    %265 = vmatprep.subr.bf16.mxu0 0
    %266 = vmatpush2.bf16.msra.mxu0 0
    %267 = vmatprep.subr.bf16.mxu0 0
    %268 = vmatpush2.bf16.msra.mxu0 0
    %269 = vmatprep.subr.bf16.mxu0 0
    %270 = vmatpush2.bf16.msra.mxu0 0
    %271 = vmatprep.subr.bf16.mxu0 0
    %272 = vmatpush2.bf16.msra.mxu0 0
    %273 = vmatprep.mubr.bf16.mxu0 0
    %274 = vmatmul.mubr.bf16.gmra.mxu0 %v182
    %v275 = vpop.f32.mrf.mxu0
    %v276 = vadd.f32 %v127, %v275
    %v277 = vpop.f32.mrf.mxu0
    %v278 = vadd.f32 %v131, %v277
    %v279 = vpop.f32.mrf.mxu0
    %v280 = vpop.f32.mrf.mxu0
    %281 = vdwg.mxu0
    %282 = vmatprep.subr.bf16.mxu0 0
    %283 = vmatpush1.bf16.msra.mxu0 0
    %284 = vmatprep.subr.bf16.mxu0 0
    %285 = vmatpush1.bf16.msra.mxu0 0
    %286 = vmatprep.subr.bf16.mxu0 0
    %287 = vmatpush1.bf16.msra.mxu0 0
    %288 = vmatprep.subr.bf16.mxu0 0
    %289 = vmatpush1.bf16.msra.mxu0 0
    %290 = vmatprep.subr.bf16.mxu0 0
    %291 = vmatpush1.bf16.msra.mxu0 0
    %292 = vmatprep.subr.bf16.mxu0 0
    %293 = vmatpush1.bf16.msra.mxu0 0
    %294 = vmatprep.subr.bf16.mxu0 0
    %295 = vmatpush1.bf16.msra.mxu0 %v198
    %296 = vmatprep.subr.bf16.mxu0 0
    %297 = vmatpush1.bf16.msra.mxu0 %v169
    %298 = vmatprep.subr.bf16.mxu0 0
    %299 = vmatpush2.bf16.msra.mxu0 0
    %300 = vmatprep.subr.bf16.mxu0 0
    %301 = vmatpush2.bf16.msra.mxu0 0
    %302 = vmatprep.subr.bf16.mxu0 0
    %303 = vmatpush2.bf16.msra.mxu0 0
    %304 = vmatprep.subr.bf16.mxu0 0
    %305 = vmatpush2.bf16.msra.mxu0 0
    %306 = vmatprep.subr.bf16.mxu0 0
    %307 = vmatpush2.bf16.msra.mxu0 0
    %308 = vmatprep.subr.bf16.mxu0 0
    %309 = vmatpush2.bf16.msra.mxu0 0
    %310 = vmatprep.subr.bf16.mxu0 0
    %311 = vmatpush2.bf16.msra.mxu0 0
    %312 = vmatprep.subr.bf16.mxu0 0
    %313 = vmatpush2.bf16.msra.mxu0 0
    %314 = vmatprep.mubr.bf16.mxu0 0
    %315 = vmatmul.mubr.bf16.gmra.mxu0 %v182
    %v316 = vpop.f32.mrf.mxu0
    %v317 = vadd.f32 %v135, %v316
    %v318 = vpop.f32.mrf.mxu0
    %v319 = vpop.f32.mrf.mxu0
    %v320 = vpop.f32.mrf.mxu0
    %321 = vdwg.mxu0
    %v322 = vmax.f32 %v235, 0.0
    %v323 = vmax.f32 %v237, 0.0
    %v324 = vmax.f32 %v276, 0.0
    %v325 = vmax.f32 %v278, 0.0
    %v326 = vmax.f32 %v317, 0.0
    %327 = vrot.lane.b32.xlu0 %v322, 96
    %v328 = vpop.permute.xlu0 %327
    %329 = vrot.lane.b32.xlu0 %v323, 96
    %v330 = vpop.permute.xlu0 %329
    %331 = vrot.lane.b32.xlu0 %v324, 96
    %v332 = vpop.permute.xlu0 %331
    %333 = vrot.lane.b32.xlu0 %v325, 96
    %v334 = vpop.permute.xlu0 %333
    %335 = vrot.lane.b32.xlu0 %v326, 96
    %v336 = vpop.permute.xlu0 %335
    %v337 = vlaneseq
    %v338 = vand.u32 %v337, 127
    %vm339 = vcmp.lt.s32.totalorder %v338, 96
    %v340 = vsel %vm339, %v334, %v336
    %v341 = vsel %vm339, %v332, %v334
    %v342 = vsel %vm339, %v330, %v332
    %v343 = vsel %vm339, %v328, %v330
    %v344 = vsel %vm339, %v336, %v328
    %v345 = vmax.f32 %v322, %v343
    %v346 = vmax.f32 %v323, %v342
    %v347 = vmax.f32 %v324, %v341
    %v348 = vmax.f32 %v325, %v340
    %v349 = vmax.f32 %v326, %v344
    %s350 = scalar_lea.vmem [#allocation11], 1
    %v351 = vld [vmem:[%s350] ss:$4 sm:$0x3f]
    %v352 = vld [vmem:[#allocation7] sm:$0xff]
    %v353 = vld [vmem:[#allocation7 + $0x8] sm:$0xff]
    %v354 = vld [vmem:[#allocation7 + $0x10] sm:$0xff]
    %v355 = vld [vmem:[#allocation7 + $0x18] sm:$0xff]
    %v356 = vld [vmem:[#allocation7 + $0x20] sm:$0xff]
    %v357 = vld [vmem:[#allocation7 + $0x28] sm:$0xff]
    %v358 = vld [vmem:[#allocation7 + $0x30] sm:$0xff]
    %v359 = vld [vmem:[#allocation7 + $0x38] sm:$0xff]
    %v360 = vld [vmem:[#allocation7 + $0x40] sm:$0xff]
    %v361 = vld [vmem:[#allocation7 + $0x48] sm:$0xff]
    %v362 = vld [vmem:[#allocation7 + $0x50] sm:$0xff]
    %v363 = vld [vmem:[#allocation7 + $0x58] sm:$0xff]
    %v364 = vld [vmem:[#allocation7 + $0x60] sm:$0xff]
    %v365 = vld [vmem:[#allocation7 + $0x68] sm:$0xff]
    %v366 = vld [vmem:[#allocation7 + $0x70] sm:$0xff]
    %v367 = vld [vmem:[#allocation7 + $0x78] sm:$0xff]
    %v368 = vld [vmem:[#allocation7 + $0x80] sm:$0xff]
    %v369 = vld [vmem:[#allocation7 + $0x88] sm:$0xff]
    %v370 = vld [vmem:[#allocation7 + $0x90] sm:$0xff]
    %v371 = vld [vmem:[#allocation7 + $0x98] sm:$0xff]
    %v372 = vld [vmem:[#allocation7 + $0xa0] sm:$0xff]
    %v373 = vld [vmem:[#allocation7 + $0xa8] sm:$0xff]
    %v374 = vld [vmem:[#allocation7 + $0xb0] sm:$0xff]
    %v375 = vld [vmem:[#allocation7 + $0xb8] sm:$0xff]
    %v376 = vld [vmem:[#allocation7 + $0xc0] sm:$0xff]
    %v377 = vld [vmem:[#allocation7 + $0xc8] sm:$0xff]
    %v378 = vld [vmem:[#allocation7 + $0xd0] sm:$0xff]
    %v379 = vld [vmem:[#allocation7 + $0xd8] sm:$0xff]
    %v380 = vld [vmem:[#allocation7 + $0xe0] sm:$0xff]
    %v381 = vld [vmem:[#allocation7 + $0xe8] sm:$0xff]
    %v382 = vld [vmem:[#allocation7 + $0xf0] sm:$0xff]
    %v383 = vld [vmem:[#allocation7 + $0xf8] sm:$0xff]
    %v384 = vld [vmem:[#allocation7 + $0x100] sm:$0xff]
    %v385 = vld [vmem:[#allocation7 + $0x108] sm:$0xff]
    %v386 = vld [vmem:[#allocation7 + $0x110] sm:$0xff]
    %v387 = vld [vmem:[#allocation7 + $0x118] sm:$0xff]
    %v388 = vld [vmem:[#allocation7 + $0x120] sm:$0xff]
    %v389 = vld [vmem:[#allocation7 + $0x128] sm:$0xff]
    %v390 = vld [vmem:[#allocation7 + $0x130] sm:$0xff]
    %v391 = vld [vmem:[#allocation7 + $0x138] sm:$0xff]
    %v392 = vld [vmem:[#allocation7 + $0x140] sm:$0xff]
    %v393 = vld [vmem:[#allocation7 + $0x148] sm:$0xff]
    %v394 = vld [vmem:[#allocation7 + $0x150] sm:$0xff]
    %v395 = vld [vmem:[#allocation7 + $0x158] sm:$0xff]
    %v396 = vld [vmem:[#allocation7 + $0x160] sm:$0xff]
    %v397 = vld [vmem:[#allocation7 + $0x168] sm:$0xff]
    %v398 = vld [vmem:[#allocation7 + $0x170] sm:$0xff]
    %v399 = vld [vmem:[#allocation7 + $0x178] sm:$0xff]
    %v400 = vld [vmem:[#allocation7 + $0x180] sm:$0xff]
    %v401 = vld [vmem:[#allocation7 + $0x188] sm:$0xff]
    %v402 = vld [vmem:[#allocation7 + $0x190] sm:$0xff]
    %v403 = vld [vmem:[#allocation7 + $0x198] sm:$0xff]
    %v404 = vld [vmem:[#allocation7 + $0x1a0] sm:$0xff]
    %v405 = vld [vmem:[#allocation7 + $0x1a8] sm:$0xff]
    %v406 = vld [vmem:[#allocation7 + $0x1b0] sm:$0xff]
    %v407 = vld [vmem:[#allocation7 + $0x1b8] sm:$0xff]
    %v408 = vld [vmem:[#allocation7 + $0x1c0] sm:$0xff]
    %v409 = vld [vmem:[#allocation7 + $0x1c8] sm:$0xff]
    %v410 = vld [vmem:[#allocation7 + $0x1d0] sm:$0xff]
    %v411 = vld [vmem:[#allocation7 + $0x1d8] sm:$0xff]
    %v412 = vld [vmem:[#allocation7 + $0x1e0] sm:$0xff]
    %v413 = vld [vmem:[#allocation7 + $0x1e8] sm:$0xff]
    %v414 = vld [vmem:[#allocation7 + $0x1f0] sm:$0xff]
    %v415 = vld [vmem:[#allocation7 + $0x1f8] sm:$0xff]
    %v416 = vld [vmem:[#allocation7 + $0x200] sm:$0xff]
    %v417 = vld [vmem:[#allocation7 + $0x208] sm:$0xff]
    %v418 = vld [vmem:[#allocation7 + $0x210] sm:$0xff]
    %v419 = vld [vmem:[#allocation7 + $0x218] sm:$0xff]
    %v420 = vld [vmem:[#allocation7 + $0x220] sm:$0xff]
    %v421 = vld [vmem:[#allocation7 + $0x228] sm:$0xff]
    %v422 = vld [vmem:[#allocation7 + $0x230] sm:$0xff]
    %v423 = vld [vmem:[#allocation7 + $0x238] sm:$0xff]
    %v424 = vld [vmem:[#allocation7 + $0x240] sm:$0xff]
    %v425 = vld [vmem:[#allocation7 + $0x248] sm:$0xff]
    %v426 = vld [vmem:[#allocation7 + $0x250] sm:$0xff]
    %v427 = vld [vmem:[#allocation7 + $0x258] sm:$0xff]
    %v428 = vld [vmem:[#allocation7 + $0x260] sm:$0xff]
    %v429 = vld [vmem:[#allocation7 + $0x268] sm:$0xff]
    %v430 = vld [vmem:[#allocation7 + $0x270] sm:$0xff]
    %v431 = vld [vmem:[#allocation7 + $0x278] sm:$0xff]
    %v432 = vld [vmem:[#allocation7 + $0x280] sm:$0xff]
    %v433 = vld [vmem:[#allocation7 + $0x288] sm:$0xff]
    %v434 = vld [vmem:[#allocation7 + $0x290] sm:$0xff]
    %v435 = vld [vmem:[#allocation7 + $0x298] sm:$0xff]
    %v436 = vld [vmem:[#allocation7 + $0x2a0] sm:$0xff]
    %v437 = vld [vmem:[#allocation7 + $0x2a8] sm:$0xff]
    %v438 = vld [vmem:[#allocation7 + $0x2b0] sm:$0xff]
    %v439 = vld [vmem:[#allocation7 + $0x2b8] sm:$0xff]
    %v440 = vld [vmem:[#allocation7 + $0x2c0] sm:$0xff]
    %v441 = vld [vmem:[#allocation7 + $0x2c8] sm:$0xff]
    %v442 = vld [vmem:[#allocation7 + $0x2d0] sm:$0xff]
    %v443 = vld [vmem:[#allocation7 + $0x2d8] sm:$0xff]
    %v444 = vld [vmem:[#allocation7 + $0x2e0] sm:$0xff]
    %v445 = vld [vmem:[#allocation7 + $0x2e8] sm:$0xff]
    %v446 = vld [vmem:[#allocation7 + $0x2f0] sm:$0xff]
    %v447 = vld [vmem:[#allocation7 + $0x2f8] sm:$0xff]
    %v448 = vld [vmem:[#allocation7 + $0x300] sm:$0xff]
    %v449 = vld [vmem:[#allocation7 + $0x308] sm:$0xff]
    %v450 = vld [vmem:[#allocation7 + $0x310] sm:$0xff]
    %v451 = vld [vmem:[#allocation7 + $0x318] sm:$0xff]
    %v452 = vld [vmem:[#allocation7 + $0x320] sm:$0xff]
    %v453 = vld [vmem:[#allocation7 + $0x328] sm:$0xff]
    %v454 = vld [vmem:[#allocation7 + $0x330] sm:$0xff]
    %v455 = vld [vmem:[#allocation7 + $0x338] sm:$0xff]
    %v456 = vld [vmem:[#allocation7 + $0x340] sm:$0xff]
    %v457 = vld [vmem:[#allocation7 + $0x348] sm:$0xff]
    %v458 = vld [vmem:[#allocation7 + $0x350] sm:$0xff]
    %v459 = vld [vmem:[#allocation7 + $0x358] sm:$0xff]
    %v460 = vld [vmem:[#allocation7 + $0x360] sm:$0xff]
    %v461 = vld [vmem:[#allocation7 + $0x368] sm:$0xff]
    %v462 = vld [vmem:[#allocation7 + $0x370] sm:$0xff]
    %v463 = vld [vmem:[#allocation7 + $0x378] sm:$0xff]
    %v464 = vld [vmem:[#allocation7 + $0x380] sm:$0xff]
    %v465 = vld [vmem:[#allocation7 + $0x388] sm:$0xff]
    %v466 = vld [vmem:[#allocation7 + $0x390] sm:$0xff]
    %v467 = vld [vmem:[#allocation7 + $0x398] sm:$0xff]
    %v468 = vld [vmem:[#allocation7 + $0x3a0] sm:$0xff]
    %v469 = vld [vmem:[#allocation7 + $0x3a8] sm:$0xff]
    %v470 = vld [vmem:[#allocation7 + $0x3b0] sm:$0xff]
    %v471 = vld [vmem:[#allocation7 + $0x3b8] sm:$0xff]
    %v472 = vld [vmem:[#allocation7 + $0x3c0] sm:$0xff]
    %v473 = vld [vmem:[#allocation7 + $0x3c8] sm:$0xff]
    %v474 = vld [vmem:[#allocation7 + $0x3d0] sm:$0xff]
    %v475 = vld [vmem:[#allocation7 + $0x3d8] sm:$0xff]
    %v476 = vld [vmem:[#allocation7 + $0x3e0] sm:$0xff]
    %v477 = vld [vmem:[#allocation7 + $0x3e8] sm:$0xff]
    %v478 = vld [vmem:[#allocation7 + $0x3f0] sm:$0xff]
    %v479 = vld [vmem:[#allocation7 + $0x3f8] sm:$0xff]
    %v480 = vld [vmem:[#allocation7 + $0x400] sm:$0xff]
    %v481 = vld [vmem:[#allocation7 + $0x408] sm:$0xff]
    %v482 = vld [vmem:[#allocation7 + $0x410] sm:$0xff]
    %v483 = vld [vmem:[#allocation7 + $0x418] sm:$0xff]
    %v484 = vld [vmem:[#allocation7 + $0x420] sm:$0xff]
    %v485 = vld [vmem:[#allocation7 + $0x428] sm:$0xff]
    %v486 = vld [vmem:[#allocation7 + $0x430] sm:$0xff]
    %v487 = vld [vmem:[#allocation7 + $0x438] sm:$0xff]
    %v488 = vld [vmem:[#allocation7 + $0x440] sm:$0xff]
    %v489 = vld [vmem:[#allocation7 + $0x448] sm:$0xff]
    %v490 = vld [vmem:[#allocation7 + $0x450] sm:$0xff]
    %v491 = vld [vmem:[#allocation7 + $0x458] sm:$0xff]
    %v492 = vld [vmem:[#allocation7 + $0x460] sm:$0xff]
    %v493 = vld [vmem:[#allocation7 + $0x468] sm:$0xff]
    %v494 = vld [vmem:[#allocation7 + $0x470] sm:$0xff]
    %v495 = vld [vmem:[#allocation7 + $0x478] sm:$0xff]
    %v496 = vld [vmem:[#allocation7 + $0x480] sm:$0xff]
    %v497 = vld [vmem:[#allocation7 + $0x488] sm:$0xff]
    %v498 = vld [vmem:[#allocation7 + $0x490] sm:$0xff]
    %v499 = vld [vmem:[#allocation7 + $0x498] sm:$0xff]
    %v500 = vld [vmem:[#allocation7 + $0x4a0] sm:$0xff]
    %v501 = vld [vmem:[#allocation7 + $0x4a8] sm:$0xff]
    %v502 = vld [vmem:[#allocation7 + $0x4b0] sm:$0xff]
    %v503 = vld [vmem:[#allocation7 + $0x4b8] sm:$0xff]
    %v504 = vld [vmem:[#allocation7 + $0x4c0] sm:$0xff]
    %v505 = vld [vmem:[#allocation7 + $0x4c8] sm:$0xff]
    %v506 = vld [vmem:[#allocation7 + $0x4d0] sm:$0xff]
    %v507 = vld [vmem:[#allocation7 + $0x4d8] sm:$0xff]
    %v508 = vld [vmem:[#allocation7 + $0x4e0] sm:$0xff]
    %v509 = vld [vmem:[#allocation7 + $0x4e8] sm:$0xff]
    %v510 = vld [vmem:[#allocation7 + $0x4f0] sm:$0xff]
    %v511 = vld [vmem:[#allocation7 + $0x4f8] sm:$0xff]
    %v512 = vld [vmem:[#allocation7 + $0x500] sm:$0xff]
    %v513 = vld [vmem:[#allocation7 + $0x508] sm:$0xff]
    %v514 = vld [vmem:[#allocation7 + $0x510] sm:$0xff]
    %v515 = vld [vmem:[#allocation7 + $0x518] sm:$0xff]
    %v516 = vld [vmem:[#allocation7 + $0x520] sm:$0xff]
    %v517 = vld [vmem:[#allocation7 + $0x528] sm:$0xff]
    %v518 = vld [vmem:[#allocation7 + $0x530] sm:$0xff]
    %v519 = vld [vmem:[#allocation7 + $0x538] sm:$0xff]
    %v520 = vld [vmem:[#allocation7 + $0x540] sm:$0xff]
    %v521 = vld [vmem:[#allocation7 + $0x548] sm:$0xff]
    %v522 = vld [vmem:[#allocation7 + $0x550] sm:$0xff]
    %v523 = vld [vmem:[#allocation7 + $0x558] sm:$0xff]
    %v524 = vld [vmem:[#allocation7 + $0x560] sm:$0xff]
    %v525 = vld [vmem:[#allocation7 + $0x568] sm:$0xff]
    %v526 = vld [vmem:[#allocation7 + $0x570] sm:$0xff]
    %v527 = vld [vmem:[#allocation7 + $0x578] sm:$0xff]
    %v528 = vld [vmem:[#allocation7 + $0x580] sm:$0xff]
    %v529 = vld [vmem:[#allocation7 + $0x588] sm:$0xff]
    %v530 = vld [vmem:[#allocation7 + $0x590] sm:$0xff]
    %v531 = vld [vmem:[#allocation7 + $0x598] sm:$0xff]
    %v532 = vld [vmem:[#allocation7 + $0x5a0] sm:$0xff]
    %v533 = vld [vmem:[#allocation7 + $0x5a8] sm:$0xff]
    %v534 = vld [vmem:[#allocation7 + $0x5b0] sm:$0xff]
    %v535 = vld [vmem:[#allocation7 + $0x5b8] sm:$0xff]
    %v536 = vld [vmem:[#allocation7 + $0x5c0] sm:$0xff]
    %v537 = vld [vmem:[#allocation7 + $0x5c8] sm:$0xff]
    %v538 = vld [vmem:[#allocation7 + $0x5d0] sm:$0xff]
    %v539 = vld [vmem:[#allocation7 + $0x5d8] sm:$0xff]
    %v540 = vld [vmem:[#allocation7 + $0x5e0] sm:$0xff]
    %v541 = vld [vmem:[#allocation7 + $0x5e8] sm:$0xff]
    %v542 = vld [vmem:[#allocation7 + $0x5f0] sm:$0xff]
    %v543 = vld [vmem:[#allocation7 + $0x5f8] sm:$0xff]
    %v544 = vld [vmem:[#allocation7 + $0x600] sm:$0xff]
    %v545 = vld [vmem:[#allocation7 + $0x608] sm:$0xff]
    %v546 = vld [vmem:[#allocation7 + $0x610] sm:$0xff]
    %v547 = vld [vmem:[#allocation7 + $0x618] sm:$0xff]
    %v548 = vld [vmem:[#allocation7 + $0x620] sm:$0xff]
    %v549 = vld [vmem:[#allocation7 + $0x628] sm:$0xff]
    %v550 = vld [vmem:[#allocation7 + $0x630] sm:$0xff]
    %v551 = vld [vmem:[#allocation7 + $0x638] sm:$0xff]
    %v552 = vld [vmem:[#allocation7 + $0x640] sm:$0xff]
    %v553 = vld [vmem:[#allocation7 + $0x648] sm:$0xff]
    %v554 = vld [vmem:[#allocation7 + $0x650] sm:$0xff]
    %v555 = vld [vmem:[#allocation7 + $0x658] sm:$0xff]
    %v556 = vld [vmem:[#allocation7 + $0x660] sm:$0xff]
    %v557 = vld [vmem:[#allocation7 + $0x668] sm:$0xff]
    %v558 = vld [vmem:[#allocation7 + $0x670] sm:$0xff]
    %v559 = vld [vmem:[#allocation7 + $0x678] sm:$0xff]
    %v560 = vld [vmem:[#allocation7 + $0x680] sm:$0xff]
    %v561 = vld [vmem:[#allocation7 + $0x688] sm:$0xff]
    %v562 = vld [vmem:[#allocation7 + $0x690] sm:$0xff]
    %v563 = vld [vmem:[#allocation7 + $0x698] sm:$0xff]
    %v564 = vld [vmem:[#allocation7 + $0x6a0] sm:$0xff]
    %v565 = vld [vmem:[#allocation7 + $0x6a8] sm:$0xff]
    %v566 = vld [vmem:[#allocation7 + $0x6b0] sm:$0xff]
    %v567 = vld [vmem:[#allocation7 + $0x6b8] sm:$0xff]
    %v568 = vld [vmem:[#allocation7 + $0x6c0] sm:$0xff]
    %v569 = vld [vmem:[#allocation7 + $0x6c8] sm:$0xff]
    %v570 = vld [vmem:[#allocation7 + $0x6d0] sm:$0xff]
    %v571 = vld [vmem:[#allocation7 + $0x6d8] sm:$0xff]
    %v572 = vld [vmem:[#allocation7 + $0x6e0] sm:$0xff]
    %v573 = vld [vmem:[#allocation7 + $0x6e8] sm:$0xff]
    %v574 = vld [vmem:[#allocation7 + $0x6f0] sm:$0xff]
    %v575 = vld [vmem:[#allocation7 + $0x6f8] sm:$0xff]
    %v576 = vld [vmem:[#allocation7 + $0x700] sm:$0xff]
    %v577 = vld [vmem:[#allocation7 + $0x708] sm:$0xff]
    %v578 = vld [vmem:[#allocation7 + $0x710] sm:$0xff]
    %v579 = vld [vmem:[#allocation7 + $0x718] sm:$0xff]
    %v580 = vld [vmem:[#allocation7 + $0x720] sm:$0xff]
    %v581 = vld [vmem:[#allocation7 + $0x728] sm:$0xff]
    %v582 = vld [vmem:[#allocation7 + $0x730] sm:$0xff]
    %v583 = vld [vmem:[#allocation7 + $0x738] sm:$0xff]
    %v584 = vld [vmem:[#allocation7 + $0x740] sm:$0xff]
    %v585 = vld [vmem:[#allocation7 + $0x748] sm:$0xff]
    %v586 = vld [vmem:[#allocation7 + $0x750] sm:$0xff]
    %v587 = vld [vmem:[#allocation7 + $0x758] sm:$0xff]
    %v588 = vld [vmem:[#allocation7 + $0x760] sm:$0xff]
    %v589 = vld [vmem:[#allocation7 + $0x768] sm:$0xff]
    %v590 = vld [vmem:[#allocation7 + $0x770] sm:$0xff]
    %v591 = vld [vmem:[#allocation7 + $0x778] sm:$0xff]
    %v592 = vpack.c.bf16 %v345, %v345
    %v593 = vpack.c.bf16 %v346, %v346
    %v594 = vpack.c.bf16 %v347, %v347
    %v595 = vpack.c.bf16 %v348, %v348
    %v596 = vpack.c.bf16 %v349, %v349
    %v598 = vlaneseq
    %v599 = vshrl.u32 %v598, 7
    %v600 = vsub.s32 0, %v599
    %v601 = vrot.slane %v351, %v600
    %v602 = vlaneseq
    %v603 = vshrl.u32 %v602, 7
    %v604 = vsub.s32 1, %v603
    %v605 = vrot.slane %v351, %v604
    %v606 = vlaneseq
    %v607 = vshrl.u32 %v606, 7
    %v608 = vsub.s32 2, %v607
    %v609 = vrot.slane %v351, %v608
    %v610 = vlaneseq
    %v611 = vshrl.u32 %v610, 7
    %v612 = vsub.s32 3, %v611
    %v613 = vrot.slane %v351, %v612
    %v614 = vlaneseq
    %v615 = vshrl.u32 %v614, 7
    %v616 = vsub.s32 4, %v615
    %v617 = vrot.slane %v351, %v616
    %v618 = vlaneseq
    %v619 = vshrl.u32 %v618, 7
    %v620 = vsub.s32 5, %v619
    %v621 = vrot.slane %v351, %v620
    %v868 = vunpack.c.l.b16 %v352
    %v869 = vunpack.c.h.b16 %v352
    %v870 = vunpack.c.l.b16 %v353
    %v871 = vunpack.c.h.b16 %v353
    %v872 = vunpack.c.l.b16 %v354
    %v873 = vunpack.c.h.b16 %v354
    %v874 = vunpack.c.l.b16 %v355
    %v875 = vunpack.c.h.b16 %v355
    %v876 = vunpack.c.l.b16 %v356
    %v877 = vunpack.c.h.b16 %v356
    %v878 = vunpack.c.l.b16 %v357
    %v879 = vunpack.c.h.b16 %v357
    %v880 = vunpack.c.l.b16 %v358
    %v881 = vunpack.c.h.b16 %v358
    %v882 = vunpack.c.l.b16 %v359
    %v883 = vunpack.c.h.b16 %v359
    %v884 = vunpack.c.l.b16 %v360
    %v885 = vunpack.c.h.b16 %v360
    %v886 = vunpack.c.l.b16 %v361
    %v887 = vunpack.c.h.b16 %v361
    %v888 = vunpack.c.l.b16 %v362
    %v889 = vunpack.c.h.b16 %v362
    %v890 = vunpack.c.l.b16 %v363
    %v891 = vunpack.c.h.b16 %v363
    %v892 = vunpack.c.l.b16 %v364
    %v893 = vunpack.c.h.b16 %v364
    %v894 = vunpack.c.l.b16 %v365
    %v895 = vunpack.c.h.b16 %v365
    %v896 = vunpack.c.l.b16 %v366
    %v897 = vunpack.c.h.b16 %v366
    %v898 = vunpack.c.l.b16 %v367
    %v899 = vunpack.c.h.b16 %v367
    %v900 = vunpack.c.l.b16 %v368
    %v901 = vunpack.c.h.b16 %v368
    %v902 = vunpack.c.l.b16 %v369
    %v903 = vunpack.c.h.b16 %v369
    %v904 = vunpack.c.l.b16 %v370
    %v905 = vunpack.c.h.b16 %v370
    %v906 = vunpack.c.l.b16 %v371
    %v907 = vunpack.c.h.b16 %v371
    %v908 = vunpack.c.l.b16 %v372
    %v909 = vunpack.c.h.b16 %v372
    %v910 = vunpack.c.l.b16 %v373
    %v911 = vunpack.c.h.b16 %v373
    %v912 = vunpack.c.l.b16 %v374
    %v913 = vunpack.c.h.b16 %v374
    %v914 = vunpack.c.l.b16 %v375
    %v915 = vunpack.c.h.b16 %v375
    %v916 = vunpack.c.l.b16 %v376
    %v917 = vunpack.c.h.b16 %v376
    %v918 = vunpack.c.l.b16 %v377
    %v919 = vunpack.c.h.b16 %v377
    %v920 = vunpack.c.l.b16 %v378
    %v921 = vunpack.c.h.b16 %v378
    %v922 = vunpack.c.l.b16 %v379
    %v923 = vunpack.c.h.b16 %v379
    %v924 = vunpack.c.l.b16 %v380
    %v925 = vunpack.c.h.b16 %v380
    %v926 = vunpack.c.l.b16 %v381
    %v927 = vunpack.c.h.b16 %v381
    %v928 = vunpack.c.l.b16 %v382
    %v929 = vunpack.c.h.b16 %v382
    %v930 = vunpack.c.l.b16 %v383
    %v931 = vunpack.c.h.b16 %v383
    %v932 = vunpack.c.l.b16 %v384
    %v933 = vunpack.c.h.b16 %v384
    %v934 = vunpack.c.l.b16 %v385
    %v935 = vunpack.c.h.b16 %v385
    %v936 = vunpack.c.l.b16 %v386
    %v937 = vunpack.c.h.b16 %v386
    %v938 = vunpack.c.l.b16 %v387
    %v939 = vunpack.c.h.b16 %v387
    %v940 = vunpack.c.l.b16 %v388
    %v941 = vunpack.c.h.b16 %v388
    %v942 = vunpack.c.l.b16 %v389
    %v943 = vunpack.c.h.b16 %v389
    %v944 = vunpack.c.l.b16 %v390
    %v945 = vunpack.c.h.b16 %v390
    %v946 = vunpack.c.l.b16 %v391
    %v947 = vunpack.c.h.b16 %v391
    %v948 = vunpack.c.l.b16 %v392
    %v949 = vunpack.c.h.b16 %v392
    %v950 = vunpack.c.l.b16 %v393
    %v951 = vunpack.c.h.b16 %v393
    %v952 = vunpack.c.l.b16 %v394
    %v953 = vunpack.c.h.b16 %v394
    %v954 = vunpack.c.l.b16 %v395
    %v955 = vunpack.c.h.b16 %v395
    %v956 = vunpack.c.l.b16 %v396
    %v957 = vunpack.c.h.b16 %v396
    %v958 = vunpack.c.l.b16 %v397
    %v959 = vunpack.c.h.b16 %v397
    %v960 = vunpack.c.l.b16 %v398
    %v961 = vunpack.c.h.b16 %v398
    %v962 = vunpack.c.l.b16 %v399
    %v963 = vunpack.c.h.b16 %v399
    %v964 = vunpack.c.l.b16 %v400
    %v965 = vunpack.c.h.b16 %v400
    %v966 = vunpack.c.l.b16 %v401
    %v967 = vunpack.c.h.b16 %v401
    %v968 = vunpack.c.l.b16 %v402
    %v969 = vunpack.c.h.b16 %v402
    %v970 = vunpack.c.l.b16 %v403
    %v971 = vunpack.c.h.b16 %v403
    %v972 = vunpack.c.l.b16 %v404
    %v973 = vunpack.c.h.b16 %v404
    %v974 = vunpack.c.l.b16 %v405
    %v975 = vunpack.c.h.b16 %v405
    %v976 = vunpack.c.l.b16 %v406
    %v977 = vunpack.c.h.b16 %v406
    %v978 = vunpack.c.l.b16 %v407
    %v979 = vunpack.c.h.b16 %v407
    %v980 = vunpack.c.l.b16 %v408
    %v981 = vunpack.c.h.b16 %v408
    %v982 = vunpack.c.l.b16 %v409
    %v983 = vunpack.c.h.b16 %v409
    %v984 = vunpack.c.l.b16 %v410
    %v985 = vunpack.c.h.b16 %v410
    %v986 = vunpack.c.l.b16 %v411
    %v987 = vunpack.c.h.b16 %v411
    %v988 = vunpack.c.l.b16 %v412
    %v989 = vunpack.c.h.b16 %v412
    %v990 = vunpack.c.l.b16 %v413
    %v991 = vunpack.c.h.b16 %v413
    %v992 = vunpack.c.l.b16 %v414
    %v993 = vunpack.c.h.b16 %v414
    %v994 = vunpack.c.l.b16 %v415
    %v995 = vunpack.c.h.b16 %v415
    %v996 = vunpack.c.l.b16 %v416
    %v997 = vunpack.c.h.b16 %v416
    %v998 = vunpack.c.l.b16 %v417
    %v999 = vunpack.c.h.b16 %v417
    %v1000 = vunpack.c.l.b16 %v418
    %v1001 = vunpack.c.h.b16 %v418
    %v1002 = vunpack.c.l.b16 %v419
    %v1003 = vunpack.c.h.b16 %v419
    %v1004 = vunpack.c.l.b16 %v420
    %v1005 = vunpack.c.h.b16 %v420
    %v1006 = vunpack.c.l.b16 %v421
    %v1007 = vunpack.c.h.b16 %v421
    %v1008 = vunpack.c.l.b16 %v422
    %v1009 = vunpack.c.h.b16 %v422
    %v1010 = vunpack.c.l.b16 %v423
    %v1011 = vunpack.c.h.b16 %v423
    %v1012 = vunpack.c.l.b16 %v424
    %v1013 = vunpack.c.h.b16 %v424
    %v1014 = vunpack.c.l.b16 %v425
    %v1015 = vunpack.c.h.b16 %v425
    %v1016 = vunpack.c.l.b16 %v426
    %v1017 = vunpack.c.h.b16 %v426
    %v1018 = vunpack.c.l.b16 %v427
    %v1019 = vunpack.c.h.b16 %v427
    %v1020 = vunpack.c.l.b16 %v428
    %v1021 = vunpack.c.h.b16 %v428
    %v1022 = vunpack.c.l.b16 %v429
    %v1023 = vunpack.c.h.b16 %v429
    %v1024 = vunpack.c.l.b16 %v430
    %v1025 = vunpack.c.h.b16 %v430
    %v1026 = vunpack.c.l.b16 %v431
    %v1027 = vunpack.c.h.b16 %v431
    %v1028 = vunpack.c.l.b16 %v432
    %v1029 = vunpack.c.h.b16 %v432
    %v1030 = vunpack.c.l.b16 %v433
    %v1031 = vunpack.c.h.b16 %v433
    %v1032 = vunpack.c.l.b16 %v434
    %v1033 = vunpack.c.h.b16 %v434
    %v1034 = vunpack.c.l.b16 %v435
    %v1035 = vunpack.c.h.b16 %v435
    %v1036 = vunpack.c.l.b16 %v436
    %v1037 = vunpack.c.h.b16 %v436
    %v1038 = vunpack.c.l.b16 %v437
    %v1039 = vunpack.c.h.b16 %v437
    %v1040 = vunpack.c.l.b16 %v438
    %v1041 = vunpack.c.h.b16 %v438
    %v1042 = vunpack.c.l.b16 %v439
    %v1043 = vunpack.c.h.b16 %v439
    %v1044 = vunpack.c.l.b16 %v440
    %v1045 = vunpack.c.h.b16 %v440
    %v1046 = vunpack.c.l.b16 %v441
    %v1047 = vunpack.c.h.b16 %v441
    %v1048 = vunpack.c.l.b16 %v442
    %v1049 = vunpack.c.h.b16 %v442
    %v1050 = vunpack.c.l.b16 %v443
    %v1051 = vunpack.c.h.b16 %v443
    %v1052 = vunpack.c.l.b16 %v444
    %v1053 = vunpack.c.h.b16 %v444
    %v1054 = vunpack.c.l.b16 %v445
    %v1055 = vunpack.c.h.b16 %v445
    %v1056 = vunpack.c.l.b16 %v446
    %v1057 = vunpack.c.h.b16 %v446
    %v1058 = vunpack.c.l.b16 %v447
    %v1059 = vunpack.c.h.b16 %v447
    %v1060 = vunpack.c.l.b16 %v448
    %v1061 = vunpack.c.h.b16 %v448
    %v1062 = vunpack.c.l.b16 %v449
    %v1063 = vunpack.c.h.b16 %v449
    %v1064 = vunpack.c.l.b16 %v450
    %v1065 = vunpack.c.h.b16 %v450
    %v1066 = vunpack.c.l.b16 %v451
    %v1067 = vunpack.c.h.b16 %v451
    %v1068 = vunpack.c.l.b16 %v452
    %v1069 = vunpack.c.h.b16 %v452
    %v1070 = vunpack.c.l.b16 %v453
    %v1071 = vunpack.c.h.b16 %v453
    %v1072 = vunpack.c.l.b16 %v454
    %v1073 = vunpack.c.h.b16 %v454
    %v1074 = vunpack.c.l.b16 %v455
    %v1075 = vunpack.c.h.b16 %v455
    %v1076 = vunpack.c.l.b16 %v456
    %v1077 = vunpack.c.h.b16 %v456
    %v1078 = vunpack.c.l.b16 %v457
    %v1079 = vunpack.c.h.b16 %v457
    %v1080 = vunpack.c.l.b16 %v458
    %v1081 = vunpack.c.h.b16 %v458
    %v1082 = vunpack.c.l.b16 %v459
    %v1083 = vunpack.c.h.b16 %v459
    %v1084 = vunpack.c.l.b16 %v460
    %v1085 = vunpack.c.h.b16 %v460
    %v1086 = vunpack.c.l.b16 %v461
    %v1087 = vunpack.c.h.b16 %v461
    %v1088 = vunpack.c.l.b16 %v462
    %v1089 = vunpack.c.h.b16 %v462
    %v1090 = vunpack.c.l.b16 %v463
    %v1091 = vunpack.c.h.b16 %v463
    %v1092 = vunpack.c.l.b16 %v464
    %v1093 = vunpack.c.h.b16 %v464
    %v1094 = vunpack.c.l.b16 %v465
    %v1095 = vunpack.c.h.b16 %v465
    %v1096 = vunpack.c.l.b16 %v466
    %v1097 = vunpack.c.h.b16 %v466
    %v1098 = vunpack.c.l.b16 %v467
    %v1099 = vunpack.c.h.b16 %v467
    %v1100 = vunpack.c.l.b16 %v468
    %v1101 = vunpack.c.h.b16 %v468
    %v1102 = vunpack.c.l.b16 %v469
    %v1103 = vunpack.c.h.b16 %v469
    %v1104 = vunpack.c.l.b16 %v470
    %v1105 = vunpack.c.h.b16 %v470
    %v1106 = vunpack.c.l.b16 %v471
    %v1107 = vunpack.c.h.b16 %v471
    %v1108 = vunpack.c.l.b16 %v472
    %v1109 = vunpack.c.h.b16 %v472
    %v1110 = vunpack.c.l.b16 %v473
    %v1111 = vunpack.c.h.b16 %v473
    %v1112 = vunpack.c.l.b16 %v474
    %v1113 = vunpack.c.h.b16 %v474
    %v1114 = vunpack.c.l.b16 %v475
    %v1115 = vunpack.c.h.b16 %v475
    %v1116 = vunpack.c.l.b16 %v476
    %v1117 = vunpack.c.h.b16 %v476
    %v1118 = vunpack.c.l.b16 %v477
    %v1119 = vunpack.c.h.b16 %v477
    %v1120 = vunpack.c.l.b16 %v478
    %v1121 = vunpack.c.h.b16 %v478
    %v1122 = vunpack.c.l.b16 %v479
    %v1123 = vunpack.c.h.b16 %v479
    %v1124 = vunpack.c.l.b16 %v480
    %v1125 = vunpack.c.h.b16 %v480
    %v1126 = vunpack.c.l.b16 %v481
    %v1127 = vunpack.c.h.b16 %v481
    %v1128 = vunpack.c.l.b16 %v482
    %v1129 = vunpack.c.h.b16 %v482
    %v1130 = vunpack.c.l.b16 %v483
    %v1131 = vunpack.c.h.b16 %v483
    %v1132 = vunpack.c.l.b16 %v484
    %v1133 = vunpack.c.h.b16 %v484
    %v1134 = vunpack.c.l.b16 %v485
    %v1135 = vunpack.c.h.b16 %v485
    %v1136 = vunpack.c.l.b16 %v486
    %v1137 = vunpack.c.h.b16 %v486
    %v1138 = vunpack.c.l.b16 %v487
    %v1139 = vunpack.c.h.b16 %v487
    %v1140 = vunpack.c.l.b16 %v488
    %v1141 = vunpack.c.h.b16 %v488
    %v1142 = vunpack.c.l.b16 %v489
    %v1143 = vunpack.c.h.b16 %v489
    %v1144 = vunpack.c.l.b16 %v490
    %v1145 = vunpack.c.h.b16 %v490
    %v1146 = vunpack.c.l.b16 %v491
    %v1147 = vunpack.c.h.b16 %v491
    %v1148 = vunpack.c.l.b16 %v492
    %v1149 = vunpack.c.h.b16 %v492
    %v1150 = vunpack.c.l.b16 %v493
    %v1151 = vunpack.c.h.b16 %v493
    %v1152 = vunpack.c.l.b16 %v494
    %v1153 = vunpack.c.h.b16 %v494
    %v1154 = vunpack.c.l.b16 %v495
    %v1155 = vunpack.c.h.b16 %v495
    %v1156 = vunpack.c.l.b16 %v496
    %v1157 = vunpack.c.h.b16 %v496
    %v1158 = vunpack.c.l.b16 %v497
    %v1159 = vunpack.c.h.b16 %v497
    %v1160 = vunpack.c.l.b16 %v498
    %v1161 = vunpack.c.h.b16 %v498
    %v1162 = vunpack.c.l.b16 %v499
    %v1163 = vunpack.c.h.b16 %v499
    %v1164 = vunpack.c.l.b16 %v500
    %v1165 = vunpack.c.h.b16 %v500
    %v1166 = vunpack.c.l.b16 %v501
    %v1167 = vunpack.c.h.b16 %v501
    %v1168 = vunpack.c.l.b16 %v502
    %v1169 = vunpack.c.h.b16 %v502
    %v1170 = vunpack.c.l.b16 %v503
    %v1171 = vunpack.c.h.b16 %v503
    %v1172 = vunpack.c.l.b16 %v504
    %v1173 = vunpack.c.h.b16 %v504
    %v1174 = vunpack.c.l.b16 %v505
    %v1175 = vunpack.c.h.b16 %v505
    %v1176 = vunpack.c.l.b16 %v506
    %v1177 = vunpack.c.h.b16 %v506
    %v1178 = vunpack.c.l.b16 %v507
    %v1179 = vunpack.c.h.b16 %v507
    %v1180 = vunpack.c.l.b16 %v508
    %v1181 = vunpack.c.h.b16 %v508
    %v1182 = vunpack.c.l.b16 %v509
    %v1183 = vunpack.c.h.b16 %v509
    %v1184 = vunpack.c.l.b16 %v510
    %v1185 = vunpack.c.h.b16 %v510
    %v1186 = vunpack.c.l.b16 %v511
    %v1187 = vunpack.c.h.b16 %v511
    %v1188 = vunpack.c.l.b16 %v512
    %v1189 = vunpack.c.h.b16 %v512
    %v1190 = vunpack.c.l.b16 %v513
    %v1191 = vunpack.c.h.b16 %v513
    %v1192 = vunpack.c.l.b16 %v514
    %v1193 = vunpack.c.h.b16 %v514
    %v1194 = vunpack.c.l.b16 %v515
    %v1195 = vunpack.c.h.b16 %v515
    %v1196 = vunpack.c.l.b16 %v516
    %v1197 = vunpack.c.h.b16 %v516
    %v1198 = vunpack.c.l.b16 %v517
    %v1199 = vunpack.c.h.b16 %v517
    %v1200 = vunpack.c.l.b16 %v518
    %v1201 = vunpack.c.h.b16 %v518
    %v1202 = vunpack.c.l.b16 %v519
    %v1203 = vunpack.c.h.b16 %v519
    %v1204 = vunpack.c.l.b16 %v520
    %v1205 = vunpack.c.h.b16 %v520
    %v1206 = vunpack.c.l.b16 %v521
    %v1207 = vunpack.c.h.b16 %v521
    %v1208 = vunpack.c.l.b16 %v522
    %v1209 = vunpack.c.h.b16 %v522
    %v1210 = vunpack.c.l.b16 %v523
    %v1211 = vunpack.c.h.b16 %v523
    %v1212 = vunpack.c.l.b16 %v524
    %v1213 = vunpack.c.h.b16 %v524
    %v1214 = vunpack.c.l.b16 %v525
    %v1215 = vunpack.c.h.b16 %v525
    %v1216 = vunpack.c.l.b16 %v526
    %v1217 = vunpack.c.h.b16 %v526
    %v1218 = vunpack.c.l.b16 %v527
    %v1219 = vunpack.c.h.b16 %v527
    %v1220 = vunpack.c.l.b16 %v528
    %v1221 = vunpack.c.h.b16 %v528
    %v1222 = vunpack.c.l.b16 %v529
    %v1223 = vunpack.c.h.b16 %v529
    %v1224 = vunpack.c.l.b16 %v530
    %v1225 = vunpack.c.h.b16 %v530
    %v1226 = vunpack.c.l.b16 %v531
    %v1227 = vunpack.c.h.b16 %v531
    %v1228 = vunpack.c.l.b16 %v532
    %v1229 = vunpack.c.h.b16 %v532
    %v1230 = vunpack.c.l.b16 %v533
    %v1231 = vunpack.c.h.b16 %v533
    %v1232 = vunpack.c.l.b16 %v534
    %v1233 = vunpack.c.h.b16 %v534
    %v1234 = vunpack.c.l.b16 %v535
    %v1235 = vunpack.c.h.b16 %v535
    %v1236 = vunpack.c.l.b16 %v536
    %v1237 = vunpack.c.h.b16 %v536
    %v1238 = vunpack.c.l.b16 %v537
    %v1239 = vunpack.c.h.b16 %v537
    %v1240 = vunpack.c.l.b16 %v538
    %v1241 = vunpack.c.h.b16 %v538
    %v1242 = vunpack.c.l.b16 %v539
    %v1243 = vunpack.c.h.b16 %v539
    %v1244 = vunpack.c.l.b16 %v540
    %v1245 = vunpack.c.h.b16 %v540
    %v1246 = vunpack.c.l.b16 %v541
    %v1247 = vunpack.c.h.b16 %v541
    %v1248 = vunpack.c.l.b16 %v542
    %v1249 = vunpack.c.h.b16 %v542
    %v1250 = vunpack.c.l.b16 %v543
    %v1251 = vunpack.c.h.b16 %v543
    %v1252 = vunpack.c.l.b16 %v544
    %v1253 = vunpack.c.h.b16 %v544
    %v1254 = vunpack.c.l.b16 %v545
    %v1255 = vunpack.c.h.b16 %v545
    %v1256 = vunpack.c.l.b16 %v546
    %v1257 = vunpack.c.h.b16 %v546
    %v1258 = vunpack.c.l.b16 %v547
    %v1259 = vunpack.c.h.b16 %v547
    %v1260 = vunpack.c.l.b16 %v548
    %v1261 = vunpack.c.h.b16 %v548
    %v1262 = vunpack.c.l.b16 %v549
    %v1263 = vunpack.c.h.b16 %v549
    %v1264 = vunpack.c.l.b16 %v550
    %v1265 = vunpack.c.h.b16 %v550
    %v1266 = vunpack.c.l.b16 %v551
    %v1267 = vunpack.c.h.b16 %v551
    %v1268 = vunpack.c.l.b16 %v552
    %v1269 = vunpack.c.h.b16 %v552
    %v1270 = vunpack.c.l.b16 %v553
    %v1271 = vunpack.c.h.b16 %v553
    %v1272 = vunpack.c.l.b16 %v554
    %v1273 = vunpack.c.h.b16 %v554
    %v1274 = vunpack.c.l.b16 %v555
    %v1275 = vunpack.c.h.b16 %v555
    %v1276 = vunpack.c.l.b16 %v556
    %v1277 = vunpack.c.h.b16 %v556
    %v1278 = vunpack.c.l.b16 %v557
    %v1279 = vunpack.c.h.b16 %v557
    %v1280 = vunpack.c.l.b16 %v558
    %v1281 = vunpack.c.h.b16 %v558
    %v1282 = vunpack.c.l.b16 %v559
    %v1283 = vunpack.c.h.b16 %v559
    %v1284 = vunpack.c.l.b16 %v560
    %v1285 = vunpack.c.h.b16 %v560
    %v1286 = vunpack.c.l.b16 %v561
    %v1287 = vunpack.c.h.b16 %v561
    %v1288 = vunpack.c.l.b16 %v562
    %v1289 = vunpack.c.h.b16 %v562
    %v1290 = vunpack.c.l.b16 %v563
    %v1291 = vunpack.c.h.b16 %v563
    %v1292 = vunpack.c.l.b16 %v564
    %v1293 = vunpack.c.h.b16 %v564
    %v1294 = vunpack.c.l.b16 %v565
    %v1295 = vunpack.c.h.b16 %v565
    %v1296 = vunpack.c.l.b16 %v566
    %v1297 = vunpack.c.h.b16 %v566
    %v1298 = vunpack.c.l.b16 %v567
    %v1299 = vunpack.c.h.b16 %v567
    %v1300 = vunpack.c.l.b16 %v568
    %v1301 = vunpack.c.h.b16 %v568
    %v1302 = vunpack.c.l.b16 %v569
    %v1303 = vunpack.c.h.b16 %v569
    %v1304 = vunpack.c.l.b16 %v570
    %v1305 = vunpack.c.h.b16 %v570
    %v1306 = vunpack.c.l.b16 %v571
    %v1307 = vunpack.c.h.b16 %v571
    %v1308 = vunpack.c.l.b16 %v572
    %v1309 = vunpack.c.h.b16 %v572
    %v1310 = vunpack.c.l.b16 %v573
    %v1311 = vunpack.c.h.b16 %v573
    %v1312 = vunpack.c.l.b16 %v574
    %v1313 = vunpack.c.h.b16 %v574
    %v1314 = vunpack.c.l.b16 %v575
    %v1315 = vunpack.c.h.b16 %v575
    %v1316 = vunpack.c.l.b16 %v576
    %v1317 = vunpack.c.h.b16 %v576
    %v1318 = vunpack.c.l.b16 %v577
    %v1319 = vunpack.c.h.b16 %v577
    %v1320 = vunpack.c.l.b16 %v578
    %v1321 = vunpack.c.h.b16 %v578
    %v1322 = vunpack.c.l.b16 %v579
    %v1323 = vunpack.c.h.b16 %v579
    %v1324 = vunpack.c.l.b16 %v580
    %v1325 = vunpack.c.h.b16 %v580
    %v1326 = vunpack.c.l.b16 %v581
    %v1327 = vunpack.c.h.b16 %v581
    %v1328 = vunpack.c.l.b16 %v582
    %v1329 = vunpack.c.h.b16 %v582
    %v1330 = vunpack.c.l.b16 %v583
    %v1331 = vunpack.c.h.b16 %v583
    %v1332 = vunpack.c.l.b16 %v584
    %v1333 = vunpack.c.h.b16 %v584
    %v1334 = vunpack.c.l.b16 %v585
    %v1335 = vunpack.c.h.b16 %v585
    %v1336 = vunpack.c.l.b16 %v586
    %v1337 = vunpack.c.h.b16 %v586
    %v1338 = vunpack.c.l.b16 %v587
    %v1339 = vunpack.c.h.b16 %v587
    %v1340 = vunpack.c.l.b16 %v588
    %v1341 = vunpack.c.h.b16 %v588
    %v1342 = vunpack.c.l.b16 %v589
    %v1343 = vunpack.c.h.b16 %v589
    %v1344 = vunpack.c.l.b16 %v590
    %v1345 = vunpack.c.h.b16 %v590
    %v1346 = vunpack.c.l.b16 %v591
    %v1347 = vunpack.c.h.b16 %v591
    %v1348 = vpack.c.b16 %v874, %v868
    %v1349 = vpack.c.b16 %v875, %v869
    %v1350 = vpack.c.b16 %v876, %v870
    %v1351 = vpack.c.b16 %v877, %v871
    %v1352 = vpack.c.b16 %v878, %v872
    %v1353 = vpack.c.b16 %v879, %v873
    %v1354 = vpack.c.b16 %v886, %v880
    %v1355 = vpack.c.b16 %v887, %v881
    %v1356 = vpack.c.b16 %v888, %v882
    %v1357 = vpack.c.b16 %v889, %v883
    %v1358 = vpack.c.b16 %v890, %v884
    %v1359 = vpack.c.b16 %v891, %v885
    %v1360 = vpack.c.b16 %v898, %v892
    %v1361 = vpack.c.b16 %v899, %v893
    %v1362 = vpack.c.b16 %v900, %v894
    %v1363 = vpack.c.b16 %v901, %v895
    %v1364 = vpack.c.b16 %v902, %v896
    %v1365 = vpack.c.b16 %v903, %v897
    %v1366 = vpack.c.b16 %v910, %v904
    %v1367 = vpack.c.b16 %v911, %v905
    %v1368 = vpack.c.b16 %v912, %v906
    %v1369 = vpack.c.b16 %v913, %v907
    %v1370 = vpack.c.b16 %v914, %v908
    %v1371 = vpack.c.b16 %v915, %v909
    %v1372 = vpack.c.b16 %v922, %v916
    %v1373 = vpack.c.b16 %v923, %v917
    %v1374 = vpack.c.b16 %v924, %v918
    %v1375 = vpack.c.b16 %v925, %v919
    %v1376 = vpack.c.b16 %v926, %v920
    %v1377 = vpack.c.b16 %v927, %v921
    %v1378 = vpack.c.b16 %v934, %v928
    %v1379 = vpack.c.b16 %v935, %v929
    %v1380 = vpack.c.b16 %v936, %v930
    %v1381 = vpack.c.b16 %v937, %v931
    %v1382 = vpack.c.b16 %v938, %v932
    %v1383 = vpack.c.b16 %v939, %v933
    %v1384 = vpack.c.b16 %v946, %v940
    %v1385 = vpack.c.b16 %v947, %v941
    %v1386 = vpack.c.b16 %v948, %v942
    %v1387 = vpack.c.b16 %v949, %v943
    %v1388 = vpack.c.b16 %v950, %v944
    %v1389 = vpack.c.b16 %v951, %v945
    %v1390 = vpack.c.b16 %v958, %v952
    %v1391 = vpack.c.b16 %v959, %v953
    %v1392 = vpack.c.b16 %v960, %v954
    %v1393 = vpack.c.b16 %v961, %v955
    %v1394 = vpack.c.b16 %v962, %v956
    %v1395 = vpack.c.b16 %v963, %v957
    %v1396 = vpack.c.b16 %v970, %v964
    %v1397 = vpack.c.b16 %v971, %v965
    %v1398 = vpack.c.b16 %v972, %v966
    %v1399 = vpack.c.b16 %v973, %v967
    %v1400 = vpack.c.b16 %v974, %v968
    %v1401 = vpack.c.b16 %v975, %v969
    %v1402 = vpack.c.b16 %v982, %v976
    %v1403 = vpack.c.b16 %v983, %v977
    %v1404 = vpack.c.b16 %v984, %v978
    %v1405 = vpack.c.b16 %v985, %v979
    %v1406 = vpack.c.b16 %v986, %v980
    %v1407 = vpack.c.b16 %v987, %v981
    %v1408 = vpack.c.b16 %v994, %v988
    %v1409 = vpack.c.b16 %v995, %v989
    %v1410 = vpack.c.b16 %v996, %v990
    %v1411 = vpack.c.b16 %v997, %v991
    %v1412 = vpack.c.b16 %v998, %v992
    %v1413 = vpack.c.b16 %v999, %v993
    %v1414 = vpack.c.b16 %v1006, %v1000
    %v1415 = vpack.c.b16 %v1007, %v1001
    %v1416 = vpack.c.b16 %v1008, %v1002
    %v1417 = vpack.c.b16 %v1009, %v1003
    %v1418 = vpack.c.b16 %v1010, %v1004
    %v1419 = vpack.c.b16 %v1011, %v1005
    %v1420 = vpack.c.b16 %v1018, %v1012
    %v1421 = vpack.c.b16 %v1019, %v1013
    %v1422 = vpack.c.b16 %v1020, %v1014
    %v1423 = vpack.c.b16 %v1021, %v1015
    %v1424 = vpack.c.b16 %v1022, %v1016
    %v1425 = vpack.c.b16 %v1023, %v1017
    %v1426 = vpack.c.b16 %v1030, %v1024
    %v1427 = vpack.c.b16 %v1031, %v1025
    %v1428 = vpack.c.b16 %v1032, %v1026
    %v1429 = vpack.c.b16 %v1033, %v1027
    %v1430 = vpack.c.b16 %v1034, %v1028
    %v1431 = vpack.c.b16 %v1035, %v1029
    %v1432 = vpack.c.b16 %v1042, %v1036
    %v1433 = vpack.c.b16 %v1043, %v1037
    %v1434 = vpack.c.b16 %v1044, %v1038
    %v1435 = vpack.c.b16 %v1045, %v1039
    %v1436 = vpack.c.b16 %v1046, %v1040
    %v1437 = vpack.c.b16 %v1047, %v1041
    %v1438 = vpack.c.b16 %v1054, %v1048
    %v1439 = vpack.c.b16 %v1055, %v1049
    %v1440 = vpack.c.b16 %v1056, %v1050
    %v1441 = vpack.c.b16 %v1057, %v1051
    %v1442 = vpack.c.b16 %v1058, %v1052
    %v1443 = vpack.c.b16 %v1059, %v1053
    %v1444 = vpack.c.b16 %v1066, %v1060
    %v1445 = vpack.c.b16 %v1067, %v1061
    %v1446 = vpack.c.b16 %v1068, %v1062
    %v1447 = vpack.c.b16 %v1069, %v1063
    %v1448 = vpack.c.b16 %v1070, %v1064
    %v1449 = vpack.c.b16 %v1071, %v1065
    %v1450 = vpack.c.b16 %v1078, %v1072
    %v1451 = vpack.c.b16 %v1079, %v1073
    %v1452 = vpack.c.b16 %v1080, %v1074
    %v1453 = vpack.c.b16 %v1081, %v1075
    %v1454 = vpack.c.b16 %v1082, %v1076
    %v1455 = vpack.c.b16 %v1083, %v1077
    %v1456 = vpack.c.b16 %v1090, %v1084
    %v1457 = vpack.c.b16 %v1091, %v1085
    %v1458 = vpack.c.b16 %v1092, %v1086
    %v1459 = vpack.c.b16 %v1093, %v1087
    %v1460 = vpack.c.b16 %v1094, %v1088
    %v1461 = vpack.c.b16 %v1095, %v1089
    %v1462 = vpack.c.b16 %v1102, %v1096
    %v1463 = vpack.c.b16 %v1103, %v1097
    %v1464 = vpack.c.b16 %v1104, %v1098
    %v1465 = vpack.c.b16 %v1105, %v1099
    %v1466 = vpack.c.b16 %v1106, %v1100
    %v1467 = vpack.c.b16 %v1107, %v1101
    %v1468 = vpack.c.b16 %v1114, %v1108
    %v1469 = vpack.c.b16 %v1115, %v1109
    %v1470 = vpack.c.b16 %v1116, %v1110
    %v1471 = vpack.c.b16 %v1117, %v1111
    %v1472 = vpack.c.b16 %v1118, %v1112
    %v1473 = vpack.c.b16 %v1119, %v1113
    %v1474 = vpack.c.b16 %v1126, %v1120
    %v1475 = vpack.c.b16 %v1127, %v1121
    %v1476 = vpack.c.b16 %v1128, %v1122
    %v1477 = vpack.c.b16 %v1129, %v1123
    %v1478 = vpack.c.b16 %v1130, %v1124
    %v1479 = vpack.c.b16 %v1131, %v1125
    %v1480 = vpack.c.b16 %v1138, %v1132
    %v1481 = vpack.c.b16 %v1139, %v1133
    %v1482 = vpack.c.b16 %v1140, %v1134
    %v1483 = vpack.c.b16 %v1141, %v1135
    %v1484 = vpack.c.b16 %v1142, %v1136
    %v1485 = vpack.c.b16 %v1143, %v1137
    %v1486 = vpack.c.b16 %v1150, %v1144
    %v1487 = vpack.c.b16 %v1151, %v1145
    %v1488 = vpack.c.b16 %v1152, %v1146
    %v1489 = vpack.c.b16 %v1153, %v1147
    %v1490 = vpack.c.b16 %v1154, %v1148
    %v1491 = vpack.c.b16 %v1155, %v1149
    %v1492 = vpack.c.b16 %v1162, %v1156
    %v1493 = vpack.c.b16 %v1163, %v1157
    %v1494 = vpack.c.b16 %v1164, %v1158
    %v1495 = vpack.c.b16 %v1165, %v1159
    %v1496 = vpack.c.b16 %v1166, %v1160
    %v1497 = vpack.c.b16 %v1167, %v1161
    %v1498 = vpack.c.b16 %v1174, %v1168
    %v1499 = vpack.c.b16 %v1175, %v1169
    %v1500 = vpack.c.b16 %v1176, %v1170
    %v1501 = vpack.c.b16 %v1177, %v1171
    %v1502 = vpack.c.b16 %v1178, %v1172
    %v1503 = vpack.c.b16 %v1179, %v1173
    %v1504 = vpack.c.b16 %v1186, %v1180
    %v1505 = vpack.c.b16 %v1187, %v1181
    %v1506 = vpack.c.b16 %v1188, %v1182
    %v1507 = vpack.c.b16 %v1189, %v1183
    %v1508 = vpack.c.b16 %v1190, %v1184
    %v1509 = vpack.c.b16 %v1191, %v1185
    %v1510 = vpack.c.b16 %v1198, %v1192
    %v1511 = vpack.c.b16 %v1199, %v1193
    %v1512 = vpack.c.b16 %v1200, %v1194
    %v1513 = vpack.c.b16 %v1201, %v1195
    %v1514 = vpack.c.b16 %v1202, %v1196
    %v1515 = vpack.c.b16 %v1203, %v1197
    %v1516 = vpack.c.b16 %v1210, %v1204
    %v1517 = vpack.c.b16 %v1211, %v1205
    %v1518 = vpack.c.b16 %v1212, %v1206
    %v1519 = vpack.c.b16 %v1213, %v1207
    %v1520 = vpack.c.b16 %v1214, %v1208
    %v1521 = vpack.c.b16 %v1215, %v1209
    %v1522 = vpack.c.b16 %v1222, %v1216
    %v1523 = vpack.c.b16 %v1223, %v1217
    %v1524 = vpack.c.b16 %v1224, %v1218
    %v1525 = vpack.c.b16 %v1225, %v1219
    %v1526 = vpack.c.b16 %v1226, %v1220
    %v1527 = vpack.c.b16 %v1227, %v1221
    %v1528 = vpack.c.b16 %v1234, %v1228
    %v1529 = vpack.c.b16 %v1235, %v1229
    %v1530 = vpack.c.b16 %v1236, %v1230
    %v1531 = vpack.c.b16 %v1237, %v1231
    %v1532 = vpack.c.b16 %v1238, %v1232
    %v1533 = vpack.c.b16 %v1239, %v1233
    %v1534 = vpack.c.b16 %v1246, %v1240
    %v1535 = vpack.c.b16 %v1247, %v1241
    %v1536 = vpack.c.b16 %v1248, %v1242
    %v1537 = vpack.c.b16 %v1249, %v1243
    %v1538 = vpack.c.b16 %v1250, %v1244
    %v1539 = vpack.c.b16 %v1251, %v1245
    %v1540 = vpack.c.b16 %v1258, %v1252
    %v1541 = vpack.c.b16 %v1259, %v1253
    %v1542 = vpack.c.b16 %v1260, %v1254
    %v1543 = vpack.c.b16 %v1261, %v1255
    %v1544 = vpack.c.b16 %v1262, %v1256
    %v1545 = vpack.c.b16 %v1263, %v1257
    %v1546 = vpack.c.b16 %v1270, %v1264
    %v1547 = vpack.c.b16 %v1271, %v1265
    %v1548 = vpack.c.b16 %v1272, %v1266
    %v1549 = vpack.c.b16 %v1273, %v1267
    %v1550 = vpack.c.b16 %v1274, %v1268
    %v1551 = vpack.c.b16 %v1275, %v1269
    %v1552 = vpack.c.b16 %v1282, %v1276
    %v1553 = vpack.c.b16 %v1283, %v1277
    %v1554 = vpack.c.b16 %v1284, %v1278
    %v1555 = vpack.c.b16 %v1285, %v1279
    %v1556 = vpack.c.b16 %v1286, %v1280
    %v1557 = vpack.c.b16 %v1287, %v1281
    %v1558 = vpack.c.b16 %v1294, %v1288
    %v1559 = vpack.c.b16 %v1295, %v1289
    %v1560 = vpack.c.b16 %v1296, %v1290
    %v1561 = vpack.c.b16 %v1297, %v1291
    %v1562 = vpack.c.b16 %v1298, %v1292
    %v1563 = vpack.c.b16 %v1299, %v1293
    %v1564 = vpack.c.b16 %v1306, %v1300
    %v1565 = vpack.c.b16 %v1307, %v1301
    %v1566 = vpack.c.b16 %v1308, %v1302
    %v1567 = vpack.c.b16 %v1309, %v1303
    %v1568 = vpack.c.b16 %v1310, %v1304
    %v1569 = vpack.c.b16 %v1311, %v1305
    %v1570 = vpack.c.b16 %v1318, %v1312
    %v1571 = vpack.c.b16 %v1319, %v1313
    %v1572 = vpack.c.b16 %v1320, %v1314
    %v1573 = vpack.c.b16 %v1321, %v1315
    %v1574 = vpack.c.b16 %v1322, %v1316
    %v1575 = vpack.c.b16 %v1323, %v1317
    %v1576 = vpack.c.b16 %v1330, %v1324
    %v1577 = vpack.c.b16 %v1331, %v1325
    %v1578 = vpack.c.b16 %v1332, %v1326
    %v1579 = vpack.c.b16 %v1333, %v1327
    %v1580 = vpack.c.b16 %v1334, %v1328
    %v1581 = vpack.c.b16 %v1335, %v1329
    %v1582 = vpack.c.b16 %v1342, %v1336
    %v1583 = vpack.c.b16 %v1343, %v1337
    %v1584 = vpack.c.b16 %v1344, %v1338
    %v1585 = vpack.c.b16 %v1345, %v1339
    %v1586 = vpack.c.b16 %v1346, %v1340
    %v1587 = vpack.c.b16 %v1347, %v1341
    %1828 = vmatprep.subr.bf16.mxu0 %v1391
    %1829 = vmatpush1.bf16.msra.mxu0 %v1390
    %1830 = vmatprep.subr.bf16.mxu0 %v1385
    %1831 = vmatpush1.bf16.msra.mxu0 %v1384
    %1832 = vmatprep.subr.bf16.mxu0 %v1379
    %1833 = vmatpush1.bf16.msra.mxu0 %v1378
    %1834 = vmatprep.subr.bf16.mxu0 %v1373
    %1835 = vmatpush1.bf16.msra.mxu0 %v1372
    %1836 = vmatprep.subr.bf16.mxu0 %v1367
    %1837 = vmatpush1.bf16.msra.mxu0 %v1366
    %1838 = vmatprep.subr.bf16.mxu0 %v1361
    %1839 = vmatpush1.bf16.msra.mxu0 %v1360
    %1840 = vmatprep.subr.bf16.mxu0 %v1355
    %1841 = vmatpush1.bf16.msra.mxu0 %v1354
    %1842 = vmatprep.subr.bf16.mxu0 %v1349
    %1843 = vmatpush1.bf16.msra.mxu0 %v1348
    %1844 = vmatprep.subr.bf16.mxu0 %v1439
    %1845 = vmatpush2.bf16.msra.mxu0 %v1438
    %1846 = vmatprep.subr.bf16.mxu0 %v1433
    %1847 = vmatpush2.bf16.msra.mxu0 %v1432
    %1848 = vmatprep.subr.bf16.mxu0 %v1427
    %1849 = vmatpush2.bf16.msra.mxu0 %v1426
    %1850 = vmatprep.subr.bf16.mxu0 %v1421
    %1851 = vmatpush2.bf16.msra.mxu0 %v1420
    %1852 = vmatprep.subr.bf16.mxu0 %v1415
    %1853 = vmatpush2.bf16.msra.mxu0 %v1414
    %1854 = vmatprep.subr.bf16.mxu0 %v1409
    %1855 = vmatpush2.bf16.msra.mxu0 %v1408
    %1856 = vmatprep.subr.bf16.mxu0 %v1403
    %1857 = vmatpush2.bf16.msra.mxu0 %v1402
    %1858 = vmatprep.subr.bf16.mxu0 %v1397
    %1859 = vmatpush2.bf16.msra.mxu0 %v1396
    %1860 = vmatprep.mubr.bf16.mxu0 %v593
    %1861 = vmatmul.mubr.bf16.gmra.mxu0 %v592
    %v1862 = vpop.f32.mrf.mxu0
    %v1863 = vadd.f32 %v601, %v1862
    %v1864 = vpop.f32.mrf.mxu0
    %v1865 = vadd.f32 %v605, %v1864
    %v1866 = vpop.f32.mrf.mxu0
    %v1867 = vpop.f32.mrf.mxu0
    %1868 = vdwg.mxu0
    %1869 = vmatprep.subr.bf16.mxu0 %v1487
    %1870 = vmatpush1.bf16.msra.mxu0 %v1486
    %1871 = vmatprep.subr.bf16.mxu0 %v1481
    %1872 = vmatpush1.bf16.msra.mxu0 %v1480
    %1873 = vmatprep.subr.bf16.mxu0 %v1475
    %1874 = vmatpush1.bf16.msra.mxu0 %v1474
    %1875 = vmatprep.subr.bf16.mxu0 %v1469
    %1876 = vmatpush1.bf16.msra.mxu0 %v1468
    %1877 = vmatprep.subr.bf16.mxu0 %v1463
    %1878 = vmatpush1.bf16.msra.mxu0 %v1462
    %1879 = vmatprep.subr.bf16.mxu0 %v1457
    %1880 = vmatpush1.bf16.msra.mxu0 %v1456
    %1881 = vmatprep.subr.bf16.mxu0 %v1451
    %1882 = vmatpush1.bf16.msra.mxu0 %v1450
    %1883 = vmatprep.subr.bf16.mxu0 %v1445
    %1884 = vmatpush1.bf16.msra.mxu0 %v1444
    %1885 = vmatprep.subr.bf16.mxu0 %v1535
    %1886 = vmatpush2.bf16.msra.mxu0 %v1534
    %1887 = vmatprep.subr.bf16.mxu0 %v1529
    %1888 = vmatpush2.bf16.msra.mxu0 %v1528
    %1889 = vmatprep.subr.bf16.mxu0 %v1523
    %1890 = vmatpush2.bf16.msra.mxu0 %v1522
    %1891 = vmatprep.subr.bf16.mxu0 %v1517
    %1892 = vmatpush2.bf16.msra.mxu0 %v1516
    %1893 = vmatprep.subr.bf16.mxu0 %v1511
    %1894 = vmatpush2.bf16.msra.mxu0 %v1510
    %1895 = vmatprep.subr.bf16.mxu0 %v1505
    %1896 = vmatpush2.bf16.msra.mxu0 %v1504
    %1897 = vmatprep.subr.bf16.mxu0 %v1499
    %1898 = vmatpush2.bf16.msra.mxu0 %v1498
    %1899 = vmatprep.subr.bf16.mxu0 %v1493
    %1900 = vmatpush2.bf16.msra.mxu0 %v1492
    %1901 = vmatprep.mubr.bf16.mxu0 %v595
    %1902 = vmatmul.mubr.bf16.gmra.mxu0 %v594
    %v1903 = vpop.f32.mrf.mxu0
    %v1904 = vadd.f32 %v1863, %v1903
    %v1905 = vpop.f32.mrf.mxu0
    %v1906 = vadd.f32 %v1865, %v1905
    %v1907 = vpop.f32.mrf.mxu0
    %v1908 = vpop.f32.mrf.mxu0
    %1909 = vdwg.mxu0
    %1910 = vmatprep.subr.bf16.mxu0 %v1583
    %1911 = vmatpush1.bf16.msra.mxu0 %v1582
    %1912 = vmatprep.subr.bf16.mxu0 %v1577
    %1913 = vmatpush1.bf16.msra.mxu0 %v1576
    %1914 = vmatprep.subr.bf16.mxu0 %v1571
    %1915 = vmatpush1.bf16.msra.mxu0 %v1570
    %1916 = vmatprep.subr.bf16.mxu0 %v1565
    %1917 = vmatpush1.bf16.msra.mxu0 %v1564
    %1918 = vmatprep.subr.bf16.mxu0 %v1559
    %1919 = vmatpush1.bf16.msra.mxu0 %v1558
    %1920 = vmatprep.subr.bf16.mxu0 %v1553
    %1921 = vmatpush1.bf16.msra.mxu0 %v1552
    %1922 = vmatprep.subr.bf16.mxu0 %v1547
    %1923 = vmatpush1.bf16.msra.mxu0 %v1546
    %1924 = vmatprep.subr.bf16.mxu0 %v1541
    %1925 = vmatpush1.bf16.msra.mxu0 %v1540
    %1926 = vmatprep.subr.bf16.mxu0 0
    %1927 = vmatpush2.bf16.msra.mxu0 0
    %1928 = vmatprep.subr.bf16.mxu0 0
    %1929 = vmatpush2.bf16.msra.mxu0 0
    %1930 = vmatprep.subr.bf16.mxu0 0
    %1931 = vmatpush2.bf16.msra.mxu0 0
    %1932 = vmatprep.subr.bf16.mxu0 0
    %1933 = vmatpush2.bf16.msra.mxu0 0
    %1934 = vmatprep.subr.bf16.mxu0 0
    %1935 = vmatpush2.bf16.msra.mxu0 0
    %1936 = vmatprep.subr.bf16.mxu0 0
    %1937 = vmatpush2.bf16.msra.mxu0 0
    %1938 = vmatprep.subr.bf16.mxu0 0
    %1939 = vmatpush2.bf16.msra.mxu0 0
    %1940 = vmatprep.subr.bf16.mxu0 0
    %1941 = vmatpush2.bf16.msra.mxu0 0
    %1942 = vmatprep.mubr.bf16.mxu0 0
    %1943 = vmatmul.mubr.bf16.gmra.mxu0 %v596
    %v1944 = vpop.f32.mrf.mxu0
    %v1945 = vadd.f32 %v1904, %v1944
    %v1946 = vpop.f32.mrf.mxu0
    %v1947 = vadd.f32 %v1906, %v1946
    %v1948 = vpop.f32.mrf.mxu0
    %v1949 = vpop.f32.mrf.mxu0
    %1950 = vdwg.mxu0
    %1951 = vmatprep.subr.bf16.mxu0 %v1393
    %1952 = vmatpush1.bf16.msra.mxu0 %v1392
    %1953 = vmatprep.subr.bf16.mxu0 %v1387
    %1954 = vmatpush1.bf16.msra.mxu0 %v1386
    %1955 = vmatprep.subr.bf16.mxu0 %v1381
    %1956 = vmatpush1.bf16.msra.mxu0 %v1380
    %1957 = vmatprep.subr.bf16.mxu0 %v1375
    %1958 = vmatpush1.bf16.msra.mxu0 %v1374
    %1959 = vmatprep.subr.bf16.mxu0 %v1369
    %1960 = vmatpush1.bf16.msra.mxu0 %v1368
    %1961 = vmatprep.subr.bf16.mxu0 %v1363
    %1962 = vmatpush1.bf16.msra.mxu0 %v1362
    %1963 = vmatprep.subr.bf16.mxu0 %v1357
    %1964 = vmatpush1.bf16.msra.mxu0 %v1356
    %1965 = vmatprep.subr.bf16.mxu0 %v1351
    %1966 = vmatpush1.bf16.msra.mxu0 %v1350
    %1967 = vmatprep.subr.bf16.mxu0 %v1441
    %1968 = vmatpush2.bf16.msra.mxu0 %v1440
    %1969 = vmatprep.subr.bf16.mxu0 %v1435
    %1970 = vmatpush2.bf16.msra.mxu0 %v1434
    %1971 = vmatprep.subr.bf16.mxu0 %v1429
    %1972 = vmatpush2.bf16.msra.mxu0 %v1428
    %1973 = vmatprep.subr.bf16.mxu0 %v1423
    %1974 = vmatpush2.bf16.msra.mxu0 %v1422
    %1975 = vmatprep.subr.bf16.mxu0 %v1417
    %1976 = vmatpush2.bf16.msra.mxu0 %v1416
    %1977 = vmatprep.subr.bf16.mxu0 %v1411
    %1978 = vmatpush2.bf16.msra.mxu0 %v1410
    %1979 = vmatprep.subr.bf16.mxu0 %v1405
    %1980 = vmatpush2.bf16.msra.mxu0 %v1404
    %1981 = vmatprep.subr.bf16.mxu0 %v1399
    %1982 = vmatpush2.bf16.msra.mxu0 %v1398
    %1983 = vmatprep.mubr.bf16.mxu0 %v593
    %1984 = vmatmul.mubr.bf16.gmra.mxu0 %v592
    %v1985 = vpop.f32.mrf.mxu0
    %v1986 = vadd.f32 %v609, %v1985
    %v1987 = vpop.f32.mrf.mxu0
    %v1988 = vadd.f32 %v613, %v1987
    %v1989 = vpop.f32.mrf.mxu0
    %v1990 = vpop.f32.mrf.mxu0
    %1991 = vdwg.mxu0
    %1992 = vmatprep.subr.bf16.mxu0 %v1489
    %1993 = vmatpush1.bf16.msra.mxu0 %v1488
    %1994 = vmatprep.subr.bf16.mxu0 %v1483
    %1995 = vmatpush1.bf16.msra.mxu0 %v1482
    %1996 = vmatprep.subr.bf16.mxu0 %v1477
    %1997 = vmatpush1.bf16.msra.mxu0 %v1476
    %1998 = vmatprep.subr.bf16.mxu0 %v1471
    %1999 = vmatpush1.bf16.msra.mxu0 %v1470
    %2000 = vmatprep.subr.bf16.mxu0 %v1465
    %2001 = vmatpush1.bf16.msra.mxu0 %v1464
    %2002 = vmatprep.subr.bf16.mxu0 %v1459
    %2003 = vmatpush1.bf16.msra.mxu0 %v1458
    %2004 = vmatprep.subr.bf16.mxu0 %v1453
    %2005 = vmatpush1.bf16.msra.mxu0 %v1452
    %2006 = vmatprep.subr.bf16.mxu0 %v1447
    %2007 = vmatpush1.bf16.msra.mxu0 %v1446
    %2008 = vmatprep.subr.bf16.mxu0 %v1537
    %2009 = vmatpush2.bf16.msra.mxu0 %v1536
    %2010 = vmatprep.subr.bf16.mxu0 %v1531
    %2011 = vmatpush2.bf16.msra.mxu0 %v1530
    %2012 = vmatprep.subr.bf16.mxu0 %v1525
    %2013 = vmatpush2.bf16.msra.mxu0 %v1524
    %2014 = vmatprep.subr.bf16.mxu0 %v1519
    %2015 = vmatpush2.bf16.msra.mxu0 %v1518
    %2016 = vmatprep.subr.bf16.mxu0 %v1513
    %2017 = vmatpush2.bf16.msra.mxu0 %v1512
    %2018 = vmatprep.subr.bf16.mxu0 %v1507
    %2019 = vmatpush2.bf16.msra.mxu0 %v1506
    %2020 = vmatprep.subr.bf16.mxu0 %v1501
    %2021 = vmatpush2.bf16.msra.mxu0 %v1500
    %2022 = vmatprep.subr.bf16.mxu0 %v1495
    %2023 = vmatpush2.bf16.msra.mxu0 %v1494
    %2024 = vmatprep.mubr.bf16.mxu0 %v595
    %2025 = vmatmul.mubr.bf16.gmra.mxu0 %v594
    %v2026 = vpop.f32.mrf.mxu0
    %v2027 = vadd.f32 %v1986, %v2026
    %v2028 = vpop.f32.mrf.mxu0
    %v2029 = vadd.f32 %v1988, %v2028
    %v2030 = vpop.f32.mrf.mxu0
    %v2031 = vpop.f32.mrf.mxu0
    %2032 = vdwg.mxu0
    %2033 = vmatprep.subr.bf16.mxu0 %v1585
    %2034 = vmatpush1.bf16.msra.mxu0 %v1584
    %2035 = vmatprep.subr.bf16.mxu0 %v1579
    %2036 = vmatpush1.bf16.msra.mxu0 %v1578
    %2037 = vmatprep.subr.bf16.mxu0 %v1573
    %2038 = vmatpush1.bf16.msra.mxu0 %v1572
    %2039 = vmatprep.subr.bf16.mxu0 %v1567
    %2040 = vmatpush1.bf16.msra.mxu0 %v1566
    %2041 = vmatprep.subr.bf16.mxu0 %v1561
    %2042 = vmatpush1.bf16.msra.mxu0 %v1560
    %2043 = vmatprep.subr.bf16.mxu0 %v1555
    %2044 = vmatpush1.bf16.msra.mxu0 %v1554
    %2045 = vmatprep.subr.bf16.mxu0 %v1549
    %2046 = vmatpush1.bf16.msra.mxu0 %v1548
    %2047 = vmatprep.subr.bf16.mxu0 %v1543
    %2048 = vmatpush1.bf16.msra.mxu0 %v1542
    %2049 = vmatprep.subr.bf16.mxu0 0
    %2050 = vmatpush2.bf16.msra.mxu0 0
    %2051 = vmatprep.subr.bf16.mxu0 0
    %2052 = vmatpush2.bf16.msra.mxu0 0
    %2053 = vmatprep.subr.bf16.mxu0 0
    %2054 = vmatpush2.bf16.msra.mxu0 0
    %2055 = vmatprep.subr.bf16.mxu0 0
    %2056 = vmatpush2.bf16.msra.mxu0 0
    %2057 = vmatprep.subr.bf16.mxu0 0
    %2058 = vmatpush2.bf16.msra.mxu0 0
    %2059 = vmatprep.subr.bf16.mxu0 0
    %2060 = vmatpush2.bf16.msra.mxu0 0
    %2061 = vmatprep.subr.bf16.mxu0 0
    %2062 = vmatpush2.bf16.msra.mxu0 0
    %2063 = vmatprep.subr.bf16.mxu0 0
    %2064 = vmatpush2.bf16.msra.mxu0 0
    %2065 = vmatprep.mubr.bf16.mxu0 0
    %2066 = vmatmul.mubr.bf16.gmra.mxu0 %v596
    %v2067 = vpop.f32.mrf.mxu0
    %v2068 = vadd.f32 %v2027, %v2067
    %v2069 = vpop.f32.mrf.mxu0
    %v2070 = vadd.f32 %v2029, %v2069
    %v2071 = vpop.f32.mrf.mxu0
    %v2072 = vpop.f32.mrf.mxu0
    %2073 = vdwg.mxu0
    %2074 = vmatprep.subr.bf16.mxu0 %v1395
    %2075 = vmatpush1.bf16.msra.mxu0 %v1394
    %2076 = vmatprep.subr.bf16.mxu0 %v1389
    %2077 = vmatpush1.bf16.msra.mxu0 %v1388
    %2078 = vmatprep.subr.bf16.mxu0 %v1383
    %2079 = vmatpush1.bf16.msra.mxu0 %v1382
    %2080 = vmatprep.subr.bf16.mxu0 %v1377
    %2081 = vmatpush1.bf16.msra.mxu0 %v1376
    %2082 = vmatprep.subr.bf16.mxu0 %v1371
    %2083 = vmatpush1.bf16.msra.mxu0 %v1370
    %2084 = vmatprep.subr.bf16.mxu0 %v1365
    %2085 = vmatpush1.bf16.msra.mxu0 %v1364
    %2086 = vmatprep.subr.bf16.mxu0 %v1359
    %2087 = vmatpush1.bf16.msra.mxu0 %v1358
    %2088 = vmatprep.subr.bf16.mxu0 %v1353
    %2089 = vmatpush1.bf16.msra.mxu0 %v1352
    %2090 = vmatprep.subr.bf16.mxu0 %v1443
    %2091 = vmatpush2.bf16.msra.mxu0 %v1442
    %2092 = vmatprep.subr.bf16.mxu0 %v1437
    %2093 = vmatpush2.bf16.msra.mxu0 %v1436
    %2094 = vmatprep.subr.bf16.mxu0 %v1431
    %2095 = vmatpush2.bf16.msra.mxu0 %v1430
    %2096 = vmatprep.subr.bf16.mxu0 %v1425
    %2097 = vmatpush2.bf16.msra.mxu0 %v1424
    %2098 = vmatprep.subr.bf16.mxu0 %v1419
    %2099 = vmatpush2.bf16.msra.mxu0 %v1418
    %2100 = vmatprep.subr.bf16.mxu0 %v1413
    %2101 = vmatpush2.bf16.msra.mxu0 %v1412
    %2102 = vmatprep.subr.bf16.mxu0 %v1407
    %2103 = vmatpush2.bf16.msra.mxu0 %v1406
    %2104 = vmatprep.subr.bf16.mxu0 %v1401
    %2105 = vmatpush2.bf16.msra.mxu0 %v1400
    %2106 = vmatprep.mubr.bf16.mxu0 %v593
    %2107 = vmatmul.mubr.bf16.gmra.mxu0 %v592
    %v2108 = vpop.f32.mrf.mxu0
    %v2109 = vadd.f32 %v617, %v2108
    %v2110 = vpop.f32.mrf.mxu0
    %v2111 = vadd.f32 %v621, %v2110
    %v2112 = vpop.f32.mrf.mxu0
    %v2113 = vpop.f32.mrf.mxu0
    %2114 = vdwg.mxu0
    %2115 = vmatprep.subr.bf16.mxu0 %v1491
    %2116 = vmatpush1.bf16.msra.mxu0 %v1490
    %2117 = vmatprep.subr.bf16.mxu0 %v1485
    %2118 = vmatpush1.bf16.msra.mxu0 %v1484
    %2119 = vmatprep.subr.bf16.mxu0 %v1479
    %2120 = vmatpush1.bf16.msra.mxu0 %v1478
    %2121 = vmatprep.subr.bf16.mxu0 %v1473
    %2122 = vmatpush1.bf16.msra.mxu0 %v1472
    %2123 = vmatprep.subr.bf16.mxu0 %v1467
    %2124 = vmatpush1.bf16.msra.mxu0 %v1466
    %2125 = vmatprep.subr.bf16.mxu0 %v1461
    %2126 = vmatpush1.bf16.msra.mxu0 %v1460
    %2127 = vmatprep.subr.bf16.mxu0 %v1455
    %2128 = vmatpush1.bf16.msra.mxu0 %v1454
    %2129 = vmatprep.subr.bf16.mxu0 %v1449
    %2130 = vmatpush1.bf16.msra.mxu0 %v1448
    %2131 = vmatprep.subr.bf16.mxu0 %v1539
    %2132 = vmatpush2.bf16.msra.mxu0 %v1538
    %2133 = vmatprep.subr.bf16.mxu0 %v1533
    %2134 = vmatpush2.bf16.msra.mxu0 %v1532
    %2135 = vmatprep.subr.bf16.mxu0 %v1527
    %2136 = vmatpush2.bf16.msra.mxu0 %v1526
    %2137 = vmatprep.subr.bf16.mxu0 %v1521
    %2138 = vmatpush2.bf16.msra.mxu0 %v1520
    %2139 = vmatprep.subr.bf16.mxu0 %v1515
    %2140 = vmatpush2.bf16.msra.mxu0 %v1514
    %2141 = vmatprep.subr.bf16.mxu0 %v1509
    %2142 = vmatpush2.bf16.msra.mxu0 %v1508
    %2143 = vmatprep.subr.bf16.mxu0 %v1503
    %2144 = vmatpush2.bf16.msra.mxu0 %v1502
    %2145 = vmatprep.subr.bf16.mxu0 %v1497
    %2146 = vmatpush2.bf16.msra.mxu0 %v1496
    %2147 = vmatprep.mubr.bf16.mxu0 %v595
    %2148 = vmatmul.mubr.bf16.gmra.mxu0 %v594
    %v2149 = vpop.f32.mrf.mxu0
    %v2150 = vadd.f32 %v2109, %v2149
    %v2151 = vpop.f32.mrf.mxu0
    %v2152 = vadd.f32 %v2111, %v2151
    %v2153 = vpop.f32.mrf.mxu0
    %v2154 = vpop.f32.mrf.mxu0
    %2155 = vdwg.mxu0
    %2156 = vmatprep.subr.bf16.mxu0 %v1587
    %2157 = vmatpush1.bf16.msra.mxu0 %v1586
    %2158 = vmatprep.subr.bf16.mxu0 %v1581
    %2159 = vmatpush1.bf16.msra.mxu0 %v1580
    %2160 = vmatprep.subr.bf16.mxu0 %v1575
    %2161 = vmatpush1.bf16.msra.mxu0 %v1574
    %2162 = vmatprep.subr.bf16.mxu0 %v1569
    %2163 = vmatpush1.bf16.msra.mxu0 %v1568
    %2164 = vmatprep.subr.bf16.mxu0 %v1563
    %2165 = vmatpush1.bf16.msra.mxu0 %v1562
    %2166 = vmatprep.subr.bf16.mxu0 %v1557
    %2167 = vmatpush1.bf16.msra.mxu0 %v1556
    %2168 = vmatprep.subr.bf16.mxu0 %v1551
    %2169 = vmatpush1.bf16.msra.mxu0 %v1550
    %2170 = vmatprep.subr.bf16.mxu0 %v1545
    %2171 = vmatpush1.bf16.msra.mxu0 %v1544
    %2172 = vmatprep.subr.bf16.mxu0 0
    %2173 = vmatpush2.bf16.msra.mxu0 0
    %2174 = vmatprep.subr.bf16.mxu0 0
    %2175 = vmatpush2.bf16.msra.mxu0 0
    %2176 = vmatprep.subr.bf16.mxu0 0
    %2177 = vmatpush2.bf16.msra.mxu0 0
    %2178 = vmatprep.subr.bf16.mxu0 0
    %2179 = vmatpush2.bf16.msra.mxu0 0
    %2180 = vmatprep.subr.bf16.mxu0 0
    %2181 = vmatpush2.bf16.msra.mxu0 0
    %2182 = vmatprep.subr.bf16.mxu0 0
    %2183 = vmatpush2.bf16.msra.mxu0 0
    %2184 = vmatprep.subr.bf16.mxu0 0
    %2185 = vmatpush2.bf16.msra.mxu0 0
    %2186 = vmatprep.subr.bf16.mxu0 0
    %2187 = vmatpush2.bf16.msra.mxu0 0
    %2188 = vmatprep.mubr.bf16.mxu0 0
    %2189 = vmatmul.mubr.bf16.gmra.mxu0 %v596
    %v2190 = vpop.f32.mrf.mxu0
    %v2191 = vadd.f32 %v2150, %v2190
    %v2192 = vpop.f32.mrf.mxu0
    %v2193 = vadd.f32 %v2152, %v2192
    %v2194 = vpop.f32.mrf.mxu0
    %v2195 = vpop.f32.mrf.mxu0
    %2196 = vdwg.mxu0
    %v2197 = vmax.f32 %v1945, 0.0
    %v2198 = vmax.f32 %v1947, 0.0
    %v2199 = vmax.f32 %v2068, 0.0
    %v2200 = vmax.f32 %v2070, 0.0
    %v2201 = vmax.f32 %v2191, 0.0
    %v2202 = vmax.f32 %v2193, 0.0
    %2203 = vrot.lane.b32.xlu0 %v2197, 64
    %v2204 = vpop.permute.xlu0 %2203
    %2205 = vrot.lane.b32.xlu0 %v2198, 64
    %v2206 = vpop.permute.xlu0 %2205
    %2207 = vrot.lane.b32.xlu0 %v2199, 64
    %v2208 = vpop.permute.xlu0 %2207
    %2209 = vrot.lane.b32.xlu0 %v2200, 64
    %v2210 = vpop.permute.xlu0 %2209
    %2211 = vrot.lane.b32.xlu0 %v2201, 64
    %v2212 = vpop.permute.xlu0 %2211
    %2213 = vrot.lane.b32.xlu0 %v2202, 64
    %v2214 = vpop.permute.xlu0 %2213
    %vm2215 = vcmp.lt.s32.totalorder %v338, 64
    %v2216 = vsel %vm2215, %v2212, %v2214
    %v2217 = vsel %vm2215, %v2210, %v2212
    %v2218 = vsel %vm2215, %v2208, %v2210
    %v2219 = vsel %vm2215, %v2206, %v2208
    %v2220 = vsel %vm2215, %v2204, %v2206
    %v2221 = vsel %vm2215, %v2214, %v2204
    %v2222 = vmax.f32 %v2197, %v2220
    %v2223 = vmax.f32 %v2198, %v2219
    %v2224 = vmax.f32 %v2199, %v2218
    %v2225 = vmax.f32 %v2200, %v2217
    %v2226 = vmax.f32 %v2201, %v2216
    %v2227 = vmax.f32 %v2202, %v2221
    %s2228 = scalar_lea.vmem [#allocation11], 2
    %v2229 = vld [vmem:[%s2228] ss:$4 sm:$0x3]
    %v2230 = vld [vmem:[#allocation8] sm:$0xff]
    %v2231 = vld [vmem:[#allocation8 + $0x8] sm:$0xff]
    %v2232 = vld [vmem:[#allocation8 + $0x10] sm:$0xff]
    %v2233 = vld [vmem:[#allocation8 + $0x18] sm:$0xff]
    %v2234 = vld [vmem:[#allocation8 + $0x20] sm:$0xff]
    %v2235 = vld [vmem:[#allocation8 + $0x28] sm:$0xff]
    %v2236 = vld [vmem:[#allocation8 + $0x30] sm:$0xff]
    %v2237 = vld [vmem:[#allocation8 + $0x38] sm:$0xff]
    %v2238 = vld [vmem:[#allocation8 + $0x40] sm:$0xff]
    %v2239 = vld [vmem:[#allocation8 + $0x48] sm:$0xff]
    %v2240 = vld [vmem:[#allocation8 + $0x50] sm:$0xff]
    %v2241 = vld [vmem:[#allocation8 + $0x58] sm:$0xff]
    %v2242 = vld [vmem:[#allocation8 + $0x60] sm:$0xff]
    %v2243 = vld [vmem:[#allocation8 + $0x68] sm:$0xff]
    %v2244 = vld [vmem:[#allocation8 + $0x70] sm:$0xff]
    %v2245 = vld [vmem:[#allocation8 + $0x78] sm:$0xff]
    %v2246 = vld [vmem:[#allocation8 + $0x80] sm:$0xff]
    %v2247 = vld [vmem:[#allocation8 + $0x88] sm:$0xff]
    %v2248 = vld [vmem:[#allocation8 + $0x90] sm:$0xff]
    %v2249 = vld [vmem:[#allocation8 + $0x98] sm:$0xff]
    %v2250 = vld [vmem:[#allocation8 + $0xa0] sm:$0xff]
    %v2251 = vld [vmem:[#allocation8 + $0xa8] sm:$0xff]
    %v2252 = vld [vmem:[#allocation8 + $0xb0] sm:$0xff]
    %v2253 = vld [vmem:[#allocation8 + $0xb8] sm:$0xff]
    %v2254 = vld [vmem:[#allocation8 + $0xc0] sm:$0xff]
    %v2255 = vld [vmem:[#allocation8 + $0xc8] sm:$0xff]
    %v2256 = vld [vmem:[#allocation8 + $0xd0] sm:$0xff]
    %v2257 = vld [vmem:[#allocation8 + $0xd8] sm:$0xff]
    %v2258 = vld [vmem:[#allocation8 + $0xe0] sm:$0xff]
    %v2259 = vld [vmem:[#allocation8 + $0xe8] sm:$0xff]
    %v2260 = vld [vmem:[#allocation8 + $0xf0] sm:$0xff]
    %v2261 = vld [vmem:[#allocation8 + $0xf8] sm:$0xff]
    %v2262 = vld [vmem:[#allocation8 + $0x100] sm:$0xff]
    %v2263 = vld [vmem:[#allocation8 + $0x108] sm:$0xff]
    %v2264 = vld [vmem:[#allocation8 + $0x110] sm:$0xff]
    %v2265 = vld [vmem:[#allocation8 + $0x118] sm:$0xff]
    %v2266 = vld [vmem:[#allocation8 + $0x120] sm:$0xff]
    %v2267 = vld [vmem:[#allocation8 + $0x128] sm:$0xff]
    %v2268 = vld [vmem:[#allocation8 + $0x130] sm:$0xff]
    %v2269 = vld [vmem:[#allocation8 + $0x138] sm:$0xff]
    %v2270 = vld [vmem:[#allocation8 + $0x140] sm:$0xff]
    %v2271 = vld [vmem:[#allocation8 + $0x148] sm:$0xff]
    %v2272 = vld [vmem:[#allocation8 + $0x150] sm:$0xff]
    %v2273 = vld [vmem:[#allocation8 + $0x158] sm:$0xff]
    %v2274 = vld [vmem:[#allocation8 + $0x160] sm:$0xff]
    %v2275 = vld [vmem:[#allocation8 + $0x168] sm:$0xff]
    %v2276 = vld [vmem:[#allocation8 + $0x170] sm:$0xff]
    %v2277 = vld [vmem:[#allocation8 + $0x178] sm:$0xff]
    %v2278 = vld [vmem:[#allocation8 + $0x180] sm:$0xff]
    %v2279 = vld [vmem:[#allocation8 + $0x188] sm:$0xff]
    %v2280 = vld [vmem:[#allocation8 + $0x190] sm:$0xff]
    %v2281 = vld [vmem:[#allocation8 + $0x198] sm:$0xff]
    %v2282 = vld [vmem:[#allocation8 + $0x1a0] sm:$0xff]
    %v2283 = vld [vmem:[#allocation8 + $0x1a8] sm:$0xff]
    %v2284 = vld [vmem:[#allocation8 + $0x1b0] sm:$0xff]
    %v2285 = vld [vmem:[#allocation8 + $0x1b8] sm:$0xff]
    %v2286 = vld [vmem:[#allocation8 + $0x1c0] sm:$0xff]
    %v2287 = vld [vmem:[#allocation8 + $0x1c8] sm:$0xff]
    %v2288 = vld [vmem:[#allocation8 + $0x1d0] sm:$0xff]
    %v2289 = vld [vmem:[#allocation8 + $0x1d8] sm:$0xff]
    %v2290 = vld [vmem:[#allocation8 + $0x1e0] sm:$0xff]
    %v2291 = vld [vmem:[#allocation8 + $0x1e8] sm:$0xff]
    %v2292 = vld [vmem:[#allocation8 + $0x1f0] sm:$0xff]
    %v2293 = vld [vmem:[#allocation8 + $0x1f8] sm:$0xff]
    %v2294 = vld [vmem:[#allocation8 + $0x200] sm:$0xff]
    %v2295 = vld [vmem:[#allocation8 + $0x208] sm:$0xff]
    %v2296 = vld [vmem:[#allocation8 + $0x210] sm:$0xff]
    %v2297 = vld [vmem:[#allocation8 + $0x218] sm:$0xff]
    %v2298 = vld [vmem:[#allocation8 + $0x220] sm:$0xff]
    %v2299 = vld [vmem:[#allocation8 + $0x228] sm:$0xff]
    %v2300 = vld [vmem:[#allocation8 + $0x230] sm:$0xff]
    %v2301 = vld [vmem:[#allocation8 + $0x238] sm:$0xff]
    %v2302 = vld [vmem:[#allocation8 + $0x240] sm:$0xff]
    %v2303 = vld [vmem:[#allocation8 + $0x248] sm:$0xff]
    %v2304 = vld [vmem:[#allocation8 + $0x250] sm:$0xff]
    %v2305 = vld [vmem:[#allocation8 + $0x258] sm:$0xff]
    %v2306 = vld [vmem:[#allocation8 + $0x260] sm:$0xff]
    %v2307 = vld [vmem:[#allocation8 + $0x268] sm:$0xff]
    %v2308 = vld [vmem:[#allocation8 + $0x270] sm:$0xff]
    %v2309 = vld [vmem:[#allocation8 + $0x278] sm:$0xff]
    %v2310 = vld [vmem:[#allocation8 + $0x280] sm:$0xff]
    %v2311 = vld [vmem:[#allocation8 + $0x288] sm:$0xff]
    %v2312 = vld [vmem:[#allocation8 + $0x290] sm:$0xff]
    %v2313 = vld [vmem:[#allocation8 + $0x298] sm:$0xff]
    %v2314 = vld [vmem:[#allocation8 + $0x2a0] sm:$0xff]
    %v2315 = vld [vmem:[#allocation8 + $0x2a8] sm:$0xff]
    %v2316 = vld [vmem:[#allocation8 + $0x2b0] sm:$0xff]
    %v2317 = vld [vmem:[#allocation8 + $0x2b8] sm:$0xff]
    %v2318 = vld [vmem:[#allocation8 + $0x2c0] sm:$0xff]
    %v2319 = vld [vmem:[#allocation8 + $0x2c8] sm:$0xff]
    %v2320 = vld [vmem:[#allocation8 + $0x2d0] sm:$0xff]
    %v2321 = vld [vmem:[#allocation8 + $0x2d8] sm:$0xff]
    %v2322 = vld [vmem:[#allocation8 + $0x2e0] sm:$0xff]
    %v2323 = vld [vmem:[#allocation8 + $0x2e8] sm:$0xff]
    %v2324 = vld [vmem:[#allocation8 + $0x2f0] sm:$0xff]
    %v2325 = vld [vmem:[#allocation8 + $0x2f8] sm:$0xff]
    %v2326 = vpack.c.bf16 %v2222, %v2222
    %v2327 = vpack.c.bf16 %v2223, %v2223
    %v2328 = vpack.c.bf16 %v2224, %v2224
    %v2329 = vpack.c.bf16 %v2225, %v2225
    %v2330 = vpack.c.bf16 %v2226, %v2226
    %v2331 = vpack.c.bf16 %v2227, %v2227
    %v2333 = vlaneseq
    %v2334 = vshrl.u32 %v2333, 7
    %v2335 = vsub.s32 0, %v2334
    %v2336 = vrot.slane %v2229, %v2335
    %v2337 = vlaneseq
    %v2338 = vshrl.u32 %v2337, 7
    %v2339 = vsub.s32 1, %v2338
    %v2340 = vrot.slane %v2229, %v2339
    %v2439 = vunpack.c.l.b16 %v2230
    %v2440 = vunpack.c.h.b16 %v2230
    %v2441 = vunpack.c.l.b16 %v2231
    %v2442 = vunpack.c.h.b16 %v2231
    %v2443 = vunpack.c.l.b16 %v2232
    %v2444 = vunpack.c.h.b16 %v2232
    %v2445 = vunpack.c.l.b16 %v2233
    %v2446 = vunpack.c.h.b16 %v2233
    %v2447 = vunpack.c.l.b16 %v2234
    %v2448 = vunpack.c.h.b16 %v2234
    %v2449 = vunpack.c.l.b16 %v2235
    %v2450 = vunpack.c.h.b16 %v2235
    %v2451 = vunpack.c.l.b16 %v2236
    %v2452 = vunpack.c.h.b16 %v2236
    %v2453 = vunpack.c.l.b16 %v2237
    %v2454 = vunpack.c.h.b16 %v2237
    %v2455 = vunpack.c.l.b16 %v2238
    %v2456 = vunpack.c.h.b16 %v2238
    %v2457 = vunpack.c.l.b16 %v2239
    %v2458 = vunpack.c.h.b16 %v2239
    %v2459 = vunpack.c.l.b16 %v2240
    %v2460 = vunpack.c.h.b16 %v2240
    %v2461 = vunpack.c.l.b16 %v2241
    %v2462 = vunpack.c.h.b16 %v2241
    %v2463 = vunpack.c.l.b16 %v2242
    %v2464 = vunpack.c.h.b16 %v2242
    %v2465 = vunpack.c.l.b16 %v2243
    %v2466 = vunpack.c.h.b16 %v2243
    %v2467 = vunpack.c.l.b16 %v2244
    %v2468 = vunpack.c.h.b16 %v2244
    %v2469 = vunpack.c.l.b16 %v2245
    %v2470 = vunpack.c.h.b16 %v2245
    %v2471 = vunpack.c.l.b16 %v2246
    %v2472 = vunpack.c.h.b16 %v2246
    %v2473 = vunpack.c.l.b16 %v2247
    %v2474 = vunpack.c.h.b16 %v2247
    %v2475 = vunpack.c.l.b16 %v2248
    %v2476 = vunpack.c.h.b16 %v2248
    %v2477 = vunpack.c.l.b16 %v2249
    %v2478 = vunpack.c.h.b16 %v2249
    %v2479 = vunpack.c.l.b16 %v2250
    %v2480 = vunpack.c.h.b16 %v2250
    %v2481 = vunpack.c.l.b16 %v2251
    %v2482 = vunpack.c.h.b16 %v2251
    %v2483 = vunpack.c.l.b16 %v2252
    %v2484 = vunpack.c.h.b16 %v2252
    %v2485 = vunpack.c.l.b16 %v2253
    %v2486 = vunpack.c.h.b16 %v2253
    %v2487 = vunpack.c.l.b16 %v2254
    %v2488 = vunpack.c.h.b16 %v2254
    %v2489 = vunpack.c.l.b16 %v2255
    %v2490 = vunpack.c.h.b16 %v2255
    %v2491 = vunpack.c.l.b16 %v2256
    %v2492 = vunpack.c.h.b16 %v2256
    %v2493 = vunpack.c.l.b16 %v2257
    %v2494 = vunpack.c.h.b16 %v2257
    %v2495 = vunpack.c.l.b16 %v2258
    %v2496 = vunpack.c.h.b16 %v2258
    %v2497 = vunpack.c.l.b16 %v2259
    %v2498 = vunpack.c.h.b16 %v2259
    %v2499 = vunpack.c.l.b16 %v2260
    %v2500 = vunpack.c.h.b16 %v2260
    %v2501 = vunpack.c.l.b16 %v2261
    %v2502 = vunpack.c.h.b16 %v2261
    %v2503 = vunpack.c.l.b16 %v2262
    %v2504 = vunpack.c.h.b16 %v2262
    %v2505 = vunpack.c.l.b16 %v2263
    %v2506 = vunpack.c.h.b16 %v2263
    %v2507 = vunpack.c.l.b16 %v2264
    %v2508 = vunpack.c.h.b16 %v2264
    %v2509 = vunpack.c.l.b16 %v2265
    %v2510 = vunpack.c.h.b16 %v2265
    %v2511 = vunpack.c.l.b16 %v2266
    %v2512 = vunpack.c.h.b16 %v2266
    %v2513 = vunpack.c.l.b16 %v2267
    %v2514 = vunpack.c.h.b16 %v2267
    %v2515 = vunpack.c.l.b16 %v2268
    %v2516 = vunpack.c.h.b16 %v2268
    %v2517 = vunpack.c.l.b16 %v2269
    %v2518 = vunpack.c.h.b16 %v2269
    %v2519 = vunpack.c.l.b16 %v2270
    %v2520 = vunpack.c.h.b16 %v2270
    %v2521 = vunpack.c.l.b16 %v2271
    %v2522 = vunpack.c.h.b16 %v2271
    %v2523 = vunpack.c.l.b16 %v2272
    %v2524 = vunpack.c.h.b16 %v2272
    %v2525 = vunpack.c.l.b16 %v2273
    %v2526 = vunpack.c.h.b16 %v2273
    %v2527 = vunpack.c.l.b16 %v2274
    %v2528 = vunpack.c.h.b16 %v2274
    %v2529 = vunpack.c.l.b16 %v2275
    %v2530 = vunpack.c.h.b16 %v2275
    %v2531 = vunpack.c.l.b16 %v2276
    %v2532 = vunpack.c.h.b16 %v2276
    %v2533 = vunpack.c.l.b16 %v2277
    %v2534 = vunpack.c.h.b16 %v2277
    %v2535 = vunpack.c.l.b16 %v2278
    %v2536 = vunpack.c.h.b16 %v2278
    %v2537 = vunpack.c.l.b16 %v2279
    %v2538 = vunpack.c.h.b16 %v2279
    %v2539 = vunpack.c.l.b16 %v2280
    %v2540 = vunpack.c.h.b16 %v2280
    %v2541 = vunpack.c.l.b16 %v2281
    %v2542 = vunpack.c.h.b16 %v2281
    %v2543 = vunpack.c.l.b16 %v2282
    %v2544 = vunpack.c.h.b16 %v2282
    %v2545 = vunpack.c.l.b16 %v2283
    %v2546 = vunpack.c.h.b16 %v2283
    %v2547 = vunpack.c.l.b16 %v2284
    %v2548 = vunpack.c.h.b16 %v2284
    %v2549 = vunpack.c.l.b16 %v2285
    %v2550 = vunpack.c.h.b16 %v2285
    %v2551 = vunpack.c.l.b16 %v2286
    %v2552 = vunpack.c.h.b16 %v2286
    %v2553 = vunpack.c.l.b16 %v2287
    %v2554 = vunpack.c.h.b16 %v2287
    %v2555 = vunpack.c.l.b16 %v2288
    %v2556 = vunpack.c.h.b16 %v2288
    %v2557 = vunpack.c.l.b16 %v2289
    %v2558 = vunpack.c.h.b16 %v2289
    %v2559 = vunpack.c.l.b16 %v2290
    %v2560 = vunpack.c.h.b16 %v2290
    %v2561 = vunpack.c.l.b16 %v2291
    %v2562 = vunpack.c.h.b16 %v2291
    %v2563 = vunpack.c.l.b16 %v2292
    %v2564 = vunpack.c.h.b16 %v2292
    %v2565 = vunpack.c.l.b16 %v2293
    %v2566 = vunpack.c.h.b16 %v2293
    %v2567 = vunpack.c.l.b16 %v2294
    %v2568 = vunpack.c.h.b16 %v2294
    %v2569 = vunpack.c.l.b16 %v2295
    %v2570 = vunpack.c.h.b16 %v2295
    %v2571 = vunpack.c.l.b16 %v2296
    %v2572 = vunpack.c.h.b16 %v2296
    %v2573 = vunpack.c.l.b16 %v2297
    %v2574 = vunpack.c.h.b16 %v2297
    %v2575 = vunpack.c.l.b16 %v2298
    %v2576 = vunpack.c.h.b16 %v2298
    %v2577 = vunpack.c.l.b16 %v2299
    %v2578 = vunpack.c.h.b16 %v2299
    %v2579 = vunpack.c.l.b16 %v2300
    %v2580 = vunpack.c.h.b16 %v2300
    %v2581 = vunpack.c.l.b16 %v2301
    %v2582 = vunpack.c.h.b16 %v2301
    %v2583 = vunpack.c.l.b16 %v2302
    %v2584 = vunpack.c.h.b16 %v2302
    %v2585 = vunpack.c.l.b16 %v2303
    %v2586 = vunpack.c.h.b16 %v2303
    %v2587 = vunpack.c.l.b16 %v2304
    %v2588 = vunpack.c.h.b16 %v2304
    %v2589 = vunpack.c.l.b16 %v2305
    %v2590 = vunpack.c.h.b16 %v2305
    %v2591 = vunpack.c.l.b16 %v2306
    %v2592 = vunpack.c.h.b16 %v2306
    %v2593 = vunpack.c.l.b16 %v2307
    %v2594 = vunpack.c.h.b16 %v2307
    %v2595 = vunpack.c.l.b16 %v2308
    %v2596 = vunpack.c.h.b16 %v2308
    %v2597 = vunpack.c.l.b16 %v2309
    %v2598 = vunpack.c.h.b16 %v2309
    %v2599 = vunpack.c.l.b16 %v2310
    %v2600 = vunpack.c.h.b16 %v2310
    %v2601 = vunpack.c.l.b16 %v2311
    %v2602 = vunpack.c.h.b16 %v2311
    %v2603 = vunpack.c.l.b16 %v2312
    %v2604 = vunpack.c.h.b16 %v2312
    %v2605 = vunpack.c.l.b16 %v2313
    %v2606 = vunpack.c.h.b16 %v2313
    %v2607 = vunpack.c.l.b16 %v2314
    %v2608 = vunpack.c.h.b16 %v2314
    %v2609 = vunpack.c.l.b16 %v2315
    %v2610 = vunpack.c.h.b16 %v2315
    %v2611 = vunpack.c.l.b16 %v2316
    %v2612 = vunpack.c.h.b16 %v2316
    %v2613 = vunpack.c.l.b16 %v2317
    %v2614 = vunpack.c.h.b16 %v2317
    %v2615 = vunpack.c.l.b16 %v2318
    %v2616 = vunpack.c.h.b16 %v2318
    %v2617 = vunpack.c.l.b16 %v2319
    %v2618 = vunpack.c.h.b16 %v2319
    %v2619 = vunpack.c.l.b16 %v2320
    %v2620 = vunpack.c.h.b16 %v2320
    %v2621 = vunpack.c.l.b16 %v2321
    %v2622 = vunpack.c.h.b16 %v2321
    %v2623 = vunpack.c.l.b16 %v2322
    %v2624 = vunpack.c.h.b16 %v2322
    %v2625 = vunpack.c.l.b16 %v2323
    %v2626 = vunpack.c.h.b16 %v2323
    %v2627 = vunpack.c.l.b16 %v2324
    %v2628 = vunpack.c.h.b16 %v2324
    %v2629 = vunpack.c.l.b16 %v2325
    %v2630 = vunpack.c.h.b16 %v2325
    %v2631 = vpack.c.b16 %v2441, %v2439
    %v2632 = vpack.c.b16 %v2442, %v2440
    %v2633 = vpack.c.b16 %v2445, %v2443
    %v2634 = vpack.c.b16 %v2446, %v2444
    %v2635 = vpack.c.b16 %v2449, %v2447
    %v2636 = vpack.c.b16 %v2450, %v2448
    %v2637 = vpack.c.b16 %v2453, %v2451
    %v2638 = vpack.c.b16 %v2454, %v2452
    %v2639 = vpack.c.b16 %v2457, %v2455
    %v2640 = vpack.c.b16 %v2458, %v2456
    %v2641 = vpack.c.b16 %v2461, %v2459
    %v2642 = vpack.c.b16 %v2462, %v2460
    %v2643 = vpack.c.b16 %v2465, %v2463
    %v2644 = vpack.c.b16 %v2466, %v2464
    %v2645 = vpack.c.b16 %v2469, %v2467
    %v2646 = vpack.c.b16 %v2470, %v2468
    %v2647 = vpack.c.b16 %v2473, %v2471
    %v2648 = vpack.c.b16 %v2474, %v2472
    %v2649 = vpack.c.b16 %v2477, %v2475
    %v2650 = vpack.c.b16 %v2478, %v2476
    %v2651 = vpack.c.b16 %v2481, %v2479
    %v2652 = vpack.c.b16 %v2482, %v2480
    %v2653 = vpack.c.b16 %v2485, %v2483
    %v2654 = vpack.c.b16 %v2486, %v2484
    %v2655 = vpack.c.b16 %v2489, %v2487
    %v2656 = vpack.c.b16 %v2490, %v2488
    %v2657 = vpack.c.b16 %v2493, %v2491
    %v2658 = vpack.c.b16 %v2494, %v2492
    %v2659 = vpack.c.b16 %v2497, %v2495
    %v2660 = vpack.c.b16 %v2498, %v2496
    %v2661 = vpack.c.b16 %v2501, %v2499
    %v2662 = vpack.c.b16 %v2502, %v2500
    %v2663 = vpack.c.b16 %v2505, %v2503
    %v2664 = vpack.c.b16 %v2506, %v2504
    %v2665 = vpack.c.b16 %v2509, %v2507
    %v2666 = vpack.c.b16 %v2510, %v2508
    %v2667 = vpack.c.b16 %v2513, %v2511
    %v2668 = vpack.c.b16 %v2514, %v2512
    %v2669 = vpack.c.b16 %v2517, %v2515
    %v2670 = vpack.c.b16 %v2518, %v2516
    %v2671 = vpack.c.b16 %v2521, %v2519
    %v2672 = vpack.c.b16 %v2522, %v2520
    %v2673 = vpack.c.b16 %v2525, %v2523
    %v2674 = vpack.c.b16 %v2526, %v2524
    %v2675 = vpack.c.b16 %v2529, %v2527
    %v2676 = vpack.c.b16 %v2530, %v2528
    %v2677 = vpack.c.b16 %v2533, %v2531
    %v2678 = vpack.c.b16 %v2534, %v2532
    %v2679 = vpack.c.b16 %v2537, %v2535
    %v2680 = vpack.c.b16 %v2538, %v2536
    %v2681 = vpack.c.b16 %v2541, %v2539
    %v2682 = vpack.c.b16 %v2542, %v2540
    %v2683 = vpack.c.b16 %v2545, %v2543
    %v2684 = vpack.c.b16 %v2546, %v2544
    %v2685 = vpack.c.b16 %v2549, %v2547
    %v2686 = vpack.c.b16 %v2550, %v2548
    %v2687 = vpack.c.b16 %v2553, %v2551
    %v2688 = vpack.c.b16 %v2554, %v2552
    %v2689 = vpack.c.b16 %v2557, %v2555
    %v2690 = vpack.c.b16 %v2558, %v2556
    %v2691 = vpack.c.b16 %v2561, %v2559
    %v2692 = vpack.c.b16 %v2562, %v2560
    %v2693 = vpack.c.b16 %v2565, %v2563
    %v2694 = vpack.c.b16 %v2566, %v2564
    %v2695 = vpack.c.b16 %v2569, %v2567
    %v2696 = vpack.c.b16 %v2570, %v2568
    %v2697 = vpack.c.b16 %v2573, %v2571
    %v2698 = vpack.c.b16 %v2574, %v2572
    %v2699 = vpack.c.b16 %v2577, %v2575
    %v2700 = vpack.c.b16 %v2578, %v2576
    %v2701 = vpack.c.b16 %v2581, %v2579
    %v2702 = vpack.c.b16 %v2582, %v2580
    %v2703 = vpack.c.b16 %v2585, %v2583
    %v2704 = vpack.c.b16 %v2586, %v2584
    %v2705 = vpack.c.b16 %v2589, %v2587
    %v2706 = vpack.c.b16 %v2590, %v2588
    %v2707 = vpack.c.b16 %v2593, %v2591
    %v2708 = vpack.c.b16 %v2594, %v2592
    %v2709 = vpack.c.b16 %v2597, %v2595
    %v2710 = vpack.c.b16 %v2598, %v2596
    %v2711 = vpack.c.b16 %v2601, %v2599
    %v2712 = vpack.c.b16 %v2602, %v2600
    %v2713 = vpack.c.b16 %v2605, %v2603
    %v2714 = vpack.c.b16 %v2606, %v2604
    %v2715 = vpack.c.b16 %v2609, %v2607
    %v2716 = vpack.c.b16 %v2610, %v2608
    %v2717 = vpack.c.b16 %v2613, %v2611
    %v2718 = vpack.c.b16 %v2614, %v2612
    %v2719 = vpack.c.b16 %v2617, %v2615
    %v2720 = vpack.c.b16 %v2618, %v2616
    %v2721 = vpack.c.b16 %v2621, %v2619
    %v2722 = vpack.c.b16 %v2622, %v2620
    %v2723 = vpack.c.b16 %v2625, %v2623
    %v2724 = vpack.c.b16 %v2626, %v2624
    %v2725 = vpack.c.b16 %v2629, %v2627
    %v2726 = vpack.c.b16 %v2630, %v2628
    %2823 = vmatprep.subr.bf16.mxu0 %v2646
    %2824 = vmatpush1.bf16.msra.mxu0 %v2645
    %2825 = vmatprep.subr.bf16.mxu0 %v2644
    %2826 = vmatpush1.bf16.msra.mxu0 %v2643
    %2827 = vmatprep.subr.bf16.mxu0 %v2642
    %2828 = vmatpush1.bf16.msra.mxu0 %v2641
    %2829 = vmatprep.subr.bf16.mxu0 %v2640
    %2830 = vmatpush1.bf16.msra.mxu0 %v2639
    %2831 = vmatprep.subr.bf16.mxu0 %v2638
    %2832 = vmatpush1.bf16.msra.mxu0 %v2637
    %2833 = vmatprep.subr.bf16.mxu0 %v2636
    %2834 = vmatpush1.bf16.msra.mxu0 %v2635
    %2835 = vmatprep.subr.bf16.mxu0 %v2634
    %2836 = vmatpush1.bf16.msra.mxu0 %v2633
    %2837 = vmatprep.subr.bf16.mxu0 %v2632
    %2838 = vmatpush1.bf16.msra.mxu0 %v2631
    %2839 = vmatprep.subr.bf16.mxu0 %v2662
    %2840 = vmatpush2.bf16.msra.mxu0 %v2661
    %2841 = vmatprep.subr.bf16.mxu0 %v2660
    %2842 = vmatpush2.bf16.msra.mxu0 %v2659
    %2843 = vmatprep.subr.bf16.mxu0 %v2658
    %2844 = vmatpush2.bf16.msra.mxu0 %v2657
    %2845 = vmatprep.subr.bf16.mxu0 %v2656
    %2846 = vmatpush2.bf16.msra.mxu0 %v2655
    %2847 = vmatprep.subr.bf16.mxu0 %v2654
    %2848 = vmatpush2.bf16.msra.mxu0 %v2653
    %2849 = vmatprep.subr.bf16.mxu0 %v2652
    %2850 = vmatpush2.bf16.msra.mxu0 %v2651
    %2851 = vmatprep.subr.bf16.mxu0 %v2650
    %2852 = vmatpush2.bf16.msra.mxu0 %v2649
    %2853 = vmatprep.subr.bf16.mxu0 %v2648
    %2854 = vmatpush2.bf16.msra.mxu0 %v2647
    %2855 = vmatprep.mubr.bf16.mxu0 %v2327
    %2856 = vmatmul.mubr.bf16.gmra.mxu0 %v2326
    %v2857 = vpop.f32.mrf.mxu0
    %v2858 = vadd.f32 %v2336, %v2857
    %v2859 = vpop.f32.mrf.mxu0
    %v2860 = vadd.f32 %v2340, %v2859
    %v2861 = vpop.f32.mrf.mxu0
    %v2862 = vpop.f32.mrf.mxu0
    %2863 = vdwg.mxu0
    %2864 = vmatprep.subr.bf16.mxu0 %v2678
    %2865 = vmatpush1.bf16.msra.mxu0 %v2677
    %2866 = vmatprep.subr.bf16.mxu0 %v2676
    %2867 = vmatpush1.bf16.msra.mxu0 %v2675
    %2868 = vmatprep.subr.bf16.mxu0 %v2674
    %2869 = vmatpush1.bf16.msra.mxu0 %v2673
    %2870 = vmatprep.subr.bf16.mxu0 %v2672
    %2871 = vmatpush1.bf16.msra.mxu0 %v2671
    %2872 = vmatprep.subr.bf16.mxu0 %v2670
    %2873 = vmatpush1.bf16.msra.mxu0 %v2669
    %2874 = vmatprep.subr.bf16.mxu0 %v2668
    %2875 = vmatpush1.bf16.msra.mxu0 %v2667
    %2876 = vmatprep.subr.bf16.mxu0 %v2666
    %2877 = vmatpush1.bf16.msra.mxu0 %v2665
    %2878 = vmatprep.subr.bf16.mxu0 %v2664
    %2879 = vmatpush1.bf16.msra.mxu0 %v2663
    %2880 = vmatprep.subr.bf16.mxu0 %v2694
    %2881 = vmatpush2.bf16.msra.mxu0 %v2693
    %2882 = vmatprep.subr.bf16.mxu0 %v2692
    %2883 = vmatpush2.bf16.msra.mxu0 %v2691
    %2884 = vmatprep.subr.bf16.mxu0 %v2690
    %2885 = vmatpush2.bf16.msra.mxu0 %v2689
    %2886 = vmatprep.subr.bf16.mxu0 %v2688
    %2887 = vmatpush2.bf16.msra.mxu0 %v2687
    %2888 = vmatprep.subr.bf16.mxu0 %v2686
    %2889 = vmatpush2.bf16.msra.mxu0 %v2685
    %2890 = vmatprep.subr.bf16.mxu0 %v2684
    %2891 = vmatpush2.bf16.msra.mxu0 %v2683
    %2892 = vmatprep.subr.bf16.mxu0 %v2682
    %2893 = vmatpush2.bf16.msra.mxu0 %v2681
    %2894 = vmatprep.subr.bf16.mxu0 %v2680
    %2895 = vmatpush2.bf16.msra.mxu0 %v2679
    %2896 = vmatprep.mubr.bf16.mxu0 %v2329
    %2897 = vmatmul.mubr.bf16.gmra.mxu0 %v2328
    %v2898 = vpop.f32.mrf.mxu0
    %v2899 = vadd.f32 %v2858, %v2898
    %v2900 = vpop.f32.mrf.mxu0
    %v2901 = vadd.f32 %v2860, %v2900
    %v2902 = vpop.f32.mrf.mxu0
    %v2903 = vpop.f32.mrf.mxu0
    %2904 = vdwg.mxu0
    %2905 = vmatprep.subr.bf16.mxu0 %v2710
    %2906 = vmatpush1.bf16.msra.mxu0 %v2709
    %2907 = vmatprep.subr.bf16.mxu0 %v2708
    %2908 = vmatpush1.bf16.msra.mxu0 %v2707
    %2909 = vmatprep.subr.bf16.mxu0 %v2706
    %2910 = vmatpush1.bf16.msra.mxu0 %v2705
    %2911 = vmatprep.subr.bf16.mxu0 %v2704
    %2912 = vmatpush1.bf16.msra.mxu0 %v2703
    %2913 = vmatprep.subr.bf16.mxu0 %v2702
    %2914 = vmatpush1.bf16.msra.mxu0 %v2701
    %2915 = vmatprep.subr.bf16.mxu0 %v2700
    %2916 = vmatpush1.bf16.msra.mxu0 %v2699
    %2917 = vmatprep.subr.bf16.mxu0 %v2698
    %2918 = vmatpush1.bf16.msra.mxu0 %v2697
    %2919 = vmatprep.subr.bf16.mxu0 %v2696
    %2920 = vmatpush1.bf16.msra.mxu0 %v2695
    %2921 = vmatprep.subr.bf16.mxu0 %v2726
    %2922 = vmatpush2.bf16.msra.mxu0 %v2725
    %2923 = vmatprep.subr.bf16.mxu0 %v2724
    %2924 = vmatpush2.bf16.msra.mxu0 %v2723
    %2925 = vmatprep.subr.bf16.mxu0 %v2722
    %2926 = vmatpush2.bf16.msra.mxu0 %v2721
    %2927 = vmatprep.subr.bf16.mxu0 %v2720
    %2928 = vmatpush2.bf16.msra.mxu0 %v2719
    %2929 = vmatprep.subr.bf16.mxu0 %v2718
    %2930 = vmatpush2.bf16.msra.mxu0 %v2717
    %2931 = vmatprep.subr.bf16.mxu0 %v2716
    %2932 = vmatpush2.bf16.msra.mxu0 %v2715
    %2933 = vmatprep.subr.bf16.mxu0 %v2714
    %2934 = vmatpush2.bf16.msra.mxu0 %v2713
    %2935 = vmatprep.subr.bf16.mxu0 %v2712
    %2936 = vmatpush2.bf16.msra.mxu0 %v2711
    %2937 = vmatprep.mubr.bf16.mxu0 %v2331
    %2938 = vmatmul.mubr.bf16.gmra.mxu0 %v2330
    %v2939 = vpop.f32.mrf.mxu0
    %v2940 = vadd.f32 %v2899, %v2939
    %v2941 = vpop.f32.mrf.mxu0
    %v2942 = vadd.f32 %v2901, %v2941
    %v2943 = vpop.f32.mrf.mxu0
    %v2944 = vpop.f32.mrf.mxu0
    %2945 = vdwg.mxu0
    %v2946 = vmax.f32 %v2940, 0.0
    %v2947 = vmax.f32 %v2942, 0.0
    %2948 = vrot.lane.b32.xlu0 %v2946, 96
    %v2949 = vpop.permute.xlu0 %2948
    %2950 = vrot.lane.b32.xlu0 %v2947, 96
    %v2951 = vpop.permute.xlu0 %2950
    %v2952 = vsel %vm339, %v2949, %v2951
    %v2953 = vsel %vm339, %v2951, %v2949
    %v2954 = vmax.f32 %v2946, %v2952
    %v2955 = vmax.f32 %v2947, %v2953
    %v2956 = vpack.c.bf16 %v2954, %v2954
    %v2957 = vpack.c.bf16 %v2955, %v2955
    %v2958 = vld [vmem:[#allocation10] sm:$0xf]
    %v2959 = vld [vmem:[#allocation10 + $0x4] sm:$0xf]
    %v2960 = vld [vmem:[#allocation10 + $0x8] sm:$0xf]
    %v2961 = vld [vmem:[#allocation10 + $0xc] sm:$0xf]
    %v2962 = vld [vmem:[#allocation10 + $0x10] sm:$0xf]
    %v2963 = vld [vmem:[#allocation10 + $0x14] sm:$0xf]
    %v2964 = vld [vmem:[#allocation10 + $0x18] sm:$0xf]
    %v2965 = vld [vmem:[#allocation10 + $0x1c] sm:$0xf]
    %v2966 = vld [vmem:[#allocation10 + $0x20] sm:$0xf]
    %v2967 = vld [vmem:[#allocation10 + $0x24] sm:$0xf]
    %v2968 = vld [vmem:[#allocation10 + $0x28] sm:$0xf]
    %v2969 = vld [vmem:[#allocation10 + $0x2c] sm:$0xf]
    %v2970 = vld [vmem:[#allocation10 + $0x30] sm:$0xf]
    %v2971 = vld [vmem:[#allocation10 + $0x34] sm:$0xf]
    %v2972 = vld [vmem:[#allocation10 + $0x38] sm:$0xf]
    %v2973 = vld [vmem:[#allocation10 + $0x3c] sm:$0xf]
    %v2974 = vld [vmem:[#allocation10 + $0x40] sm:$0xf]
    %v2975 = vld [vmem:[#allocation10 + $0x44] sm:$0xf]
    %v2976 = vld [vmem:[#allocation10 + $0x48] sm:$0xf]
    %v2977 = vld [vmem:[#allocation10 + $0x4c] sm:$0xf]
    %v2978 = vld [vmem:[#allocation10 + $0x50] sm:$0xf]
    %v2979 = vld [vmem:[#allocation10 + $0x54] sm:$0xf]
    %v2980 = vld [vmem:[#allocation10 + $0x58] sm:$0xf]
    %v2981 = vld [vmem:[#allocation10 + $0x5c] sm:$0xf]
    %v2982 = vld [vmem:[#allocation10 + $0x60] sm:$0xf]
    %v2983 = vld [vmem:[#allocation10 + $0x64] sm:$0xf]
    %v2984 = vld [vmem:[#allocation10 + $0x68] sm:$0xf]
    %v2985 = vld [vmem:[#allocation10 + $0x6c] sm:$0xf]
    %v2986 = vld [vmem:[#allocation10 + $0x70] sm:$0xf]
    %v2987 = vld [vmem:[#allocation10 + $0x74] sm:$0xf]
    %v2988 = vld [vmem:[#allocation10 + $0x78] sm:$0xf]
    %v2989 = vld [vmem:[#allocation10 + $0x7c] sm:$0xf]
    %v2990 = vld [vmem:[#allocation11 + $0x3] sm:$0x1]
    %v2991 = vlaneseq
    %v2992 = vshrl.u32 %v2991, 7
    %v2993 = vsub.s32 0, %v2992
    %v2994 = vrot.slane %v2990, %v2993
    %v3027 = vunpack.c.l.b16 %v2958
    %v3028 = vunpack.c.l.b16 %v2959
    %v3029 = vunpack.c.l.b16 %v2960
    %v3030 = vunpack.c.l.b16 %v2961
    %v3031 = vunpack.c.l.b16 %v2962
    %v3032 = vunpack.c.l.b16 %v2963
    %v3033 = vunpack.c.l.b16 %v2964
    %v3034 = vunpack.c.l.b16 %v2965
    %v3035 = vunpack.c.l.b16 %v2966
    %v3036 = vunpack.c.l.b16 %v2967
    %v3037 = vunpack.c.l.b16 %v2968
    %v3038 = vunpack.c.l.b16 %v2969
    %v3039 = vunpack.c.l.b16 %v2970
    %v3040 = vunpack.c.l.b16 %v2971
    %v3041 = vunpack.c.l.b16 %v2972
    %v3042 = vunpack.c.l.b16 %v2973
    %v3043 = vunpack.c.l.b16 %v2974
    %v3044 = vunpack.c.l.b16 %v2975
    %v3045 = vunpack.c.l.b16 %v2976
    %v3046 = vunpack.c.l.b16 %v2977
    %v3047 = vunpack.c.l.b16 %v2978
    %v3048 = vunpack.c.l.b16 %v2979
    %v3049 = vunpack.c.l.b16 %v2980
    %v3050 = vunpack.c.l.b16 %v2981
    %v3051 = vunpack.c.l.b16 %v2982
    %v3052 = vunpack.c.l.b16 %v2983
    %v3053 = vunpack.c.l.b16 %v2984
    %v3054 = vunpack.c.l.b16 %v2985
    %v3055 = vunpack.c.l.b16 %v2986
    %v3056 = vunpack.c.l.b16 %v2987
    %v3057 = vunpack.c.l.b16 %v2988
    %v3058 = vunpack.c.l.b16 %v2989
    %v3059 = vpack.c.b16 %v3028, %v3027
    %v3060 = vpack.c.b16 %v3030, %v3029
    %v3061 = vpack.c.b16 %v3032, %v3031
    %v3062 = vpack.c.b16 %v3034, %v3033
    %v3063 = vpack.c.b16 %v3036, %v3035
    %v3064 = vpack.c.b16 %v3038, %v3037
    %v3065 = vpack.c.b16 %v3040, %v3039
    %v3066 = vpack.c.b16 %v3042, %v3041
    %v3067 = vpack.c.b16 %v3044, %v3043
    %v3068 = vpack.c.b16 %v3046, %v3045
    %v3069 = vpack.c.b16 %v3048, %v3047
    %v3070 = vpack.c.b16 %v3050, %v3049
    %v3071 = vpack.c.b16 %v3052, %v3051
    %v3072 = vpack.c.b16 %v3054, %v3053
    %v3073 = vpack.c.b16 %v3056, %v3055
    %v3074 = vpack.c.b16 %v3058, %v3057
    %3091 = vmatprep.subr.bf16.mxu0 0
    %3092 = vmatpush1.bf16.msra.mxu0 %v3066
    %3093 = vmatprep.subr.bf16.mxu0 0
    %3094 = vmatpush1.bf16.msra.mxu0 %v3065
    %3095 = vmatprep.subr.bf16.mxu0 0
    %3096 = vmatpush1.bf16.msra.mxu0 %v3064
    %3097 = vmatprep.subr.bf16.mxu0 0
    %3098 = vmatpush1.bf16.msra.mxu0 %v3063
    %3099 = vmatprep.subr.bf16.mxu0 0
    %3100 = vmatpush1.bf16.msra.mxu0 %v3062
    %3101 = vmatprep.subr.bf16.mxu0 0
    %3102 = vmatpush1.bf16.msra.mxu0 %v3061
    %3103 = vmatprep.subr.bf16.mxu0 0
    %3104 = vmatpush1.bf16.msra.mxu0 %v3060
    %3105 = vmatprep.subr.bf16.mxu0 0
    %3106 = vmatpush1.bf16.msra.mxu0 %v3059
    %3107 = vmatprep.subr.bf16.mxu0 0
    %3108 = vmatpush2.bf16.msra.mxu0 %v3074
    %3109 = vmatprep.subr.bf16.mxu0 0
    %3110 = vmatpush2.bf16.msra.mxu0 %v3073
    %3111 = vmatprep.subr.bf16.mxu0 0
    %3112 = vmatpush2.bf16.msra.mxu0 %v3072
    %3113 = vmatprep.subr.bf16.mxu0 0
    %3114 = vmatpush2.bf16.msra.mxu0 %v3071
    %3115 = vmatprep.subr.bf16.mxu0 0
    %3116 = vmatpush2.bf16.msra.mxu0 %v3070
    %3117 = vmatprep.subr.bf16.mxu0 0
    %3118 = vmatpush2.bf16.msra.mxu0 %v3069
    %3119 = vmatprep.subr.bf16.mxu0 0
    %3120 = vmatpush2.bf16.msra.mxu0 %v3068
    %3121 = vmatprep.subr.bf16.mxu0 0
    %3122 = vmatpush2.bf16.msra.mxu0 %v3067
    %3123 = vmatprep.mubr.bf16.mxu0 %v2957
    %3124 = vmatmul.mubr.bf16.gmra.mxu0 %v2956
    %v3125 = vpop.f32.mrf.mxu0
    %v3126 = vadd.f32 %v2994, %v3125
    %v3127 = vpop.f32.mrf.mxu0
    %v3128 = vpop.f32.mrf.mxu0
    %v3129 = vpop.f32.mrf.mxu0
    %3130 = vdwg.mxu0
    %3131 = vst [vmem:[#allocation13] sm:$0xff] %v2954
    %3132 = vst [vmem:[#allocation13 + $0x8] sm:$0xff] %v2955
    %3133 = vst [vmem:[#allocation13 + $0x10] sm:$0xff] %v3126
    // Predicated region
    $region50: #{tpu_custom_call.1} parent=1 // pred_check
      _
    $region51: #{tpu_custom_call.1} parent=1 // pred_check_branch
      %3135 = sbr.rel (0) target = $region53
    $region52: #{tpu_custom_call.1} parent=1 // pred_region
      %s3137 = ssub.s32 384, 384
      %3138 = vsyncadd [#allocation4], %s3137
      %s3140 = sshll.u32 [#allocation13], 4
      %s3141 = int_to_ptr.vmem [resolvable:$true] %s3140
      %3143 = dma.vmem_to_hbm [thread:$0]  %s3141, 384, %s6, [#allocation4]
    $region53: #{tpu_custom_call.1} parent=1 // pred_fallthru
      _
    // Predicated region
    $region54: #{tpu_custom_call.1} parent=1 // pred_check
      _
    $region55: #{tpu_custom_call.1} parent=1 // pred_check_branch
      %3145 = sbr.rel (0) target = $region57
    $region56: #{tpu_custom_call.1} parent=1 // pred_region
      %3146 = dma.done [#allocation4], 384
    $region57: #{tpu_custom_call.1} parent=1 // pred_fallthru
      _
    %3147 = vsyncpa [#allocation3], 1
    %3148 = vsyncpa [#allocation6], 1
    %3149 = vsyncpa [#allocation9], 1
    %3150 = vsyncpa [#allocation12], 1
    %3151 = vsyncpa [#allocation4], 1

</llo_original>
